<compile_context>
chip_gen: v5e
topology: v5e:2x2
jax: 0.10.0
libtpu: 0.0.40
codegen_flags: <defaults>
</compile_context>

<pallas_src>
import functools

import jax
import jax.numpy as jnp
from jax import lax
from jax.experimental import pallas as pl
from jax.experimental.pallas import tpu as pltpu

BN_EPS = 1e-5


def _bn_affine(acc, fold, gamma, beta, inv_m, w):
    """Training-mode BN over all rows of `acc` (rows = N*H, lanes = W*C).

    Stats stay in f32 (sum + sum-of-squares, folded to per-channel with a tiny
    (W*C, C) matmul).  Returns scale/bias tiled to (1, W*C) so normalization is
    a single fused multiply-add on the lane-dense accumulator.
    """
    s = jnp.sum(acc, axis=0, keepdims=True)                       # (1, W*C)
    ss = jnp.sum(acc * acc, axis=0, keepdims=True)                # (1, W*C)
    s_c = jnp.dot(s, fold, preferred_element_type=jnp.float32)    # (1, C)
    ss_c = jnp.dot(ss, fold, preferred_element_type=jnp.float32)  # (1, C)
    mean = s_c * inv_m
    var = ss_c * inv_m - mean * mean                              # biased var
    scale = gamma * lax.rsqrt(var + BN_EPS)                       # (1, C)
    bias = beta - mean * scale                                    # (1, C)
    return jnp.tile(scale, (1, w)), jnp.tile(bias, (1, w))        # (1, W*C)


def _resblock_kernel(x_ref, b1_ref, g1_ref, be1_ref, b2_ref, g2_ref, be2_ref,
                     fold_ref, out_ref, *, n, h, w, c):
    # x_ref   : (N*H, W*C)   f32   lane-dense activation rows (NHWC, W*C fused)
    # b1/b2   : (3*W*C, W*C) bf16  stacked banded conv weights [ky=0; ky=1; ky=2]
    # g*/be*  : (1, C)       f32   bn gamma / beta
    # fold    : (W*C, C)     f32   per-channel reduction matrix (tiled identity)
    # out_ref : (N*H, W*C)   f32
    NH, WC = n * h, w * c
    inv_m = 1.0 / float(n * h * w)

    x = x_ref[...]                                                # (NH, WC) f32
    fold = fold_ref[...]

    # h-position of every row (hoisted: shared by both convs).  Rows with h==0
    # must see a zero "row above", rows with h==H-1 a zero "row below".
    hpos = lax.broadcasted_iota(jnp.int32, (NH, WC), 0) % h
    not_top = hpos != 0
    not_bot = hpos != (h - 1)

    def conv3x3(rows, band_ref):
        # Neighbour rows via XLU sublane rotations (no padded copy); the W/kx
        # zero padding is baked into the banded weights.  One K=3*W*C matmul.
        up = jnp.where(not_top, pltpu.roll(rows, shift=1, axis=0), 0.0)
        dn = jnp.where(not_bot, pltpu.roll(rows, shift=NH - 1, axis=0), 0.0)
        lhs = jnp.concatenate([up, rows, dn], axis=1)             # (NH, 3*WC)
        return jnp.dot(lhs.astype(jnp.bfloat16), band_ref[...],
                       preferred_element_type=jnp.float32)        # (NH, WC) f32

    # ---- conv1 -> bn1 -> relu -------------------------------------------------
    acc1 = conv3x3(x, b1_ref)
    sc1, bi1 = _bn_affine(acc1, fold, g1_ref[...], be1_ref[...], inv_m, w)
    y1 = jnp.maximum(acc1 * sc1 + bi1, 0.0)                       # (NH, WC) f32

    # ---- conv2 -> bn2 -----------------------------------------------------------
    acc2 = conv3x3(y1, b2_ref)
    sc2, bi2 = _bn_affine(acc2, fold, g2_ref[...], be2_ref[...], inv_m, w)
    y2 = acc2 * sc2 + bi2

    # ---- residual add (original f32 x) + relu, lane-dense store -----------------
    out_ref[...] = jnp.maximum(y2 + x, 0.0)


def _stacked_band(w_oihw, width, c):
    """(Cout, Cin, 3, 3) OIHW -> (3*W*C, W*C) bf16 stacked banded matrices.

    Band[ky*W*C + wi*C + ci, wo*C + co] = w[co, ci, ky, kx] with kx = wi - wo + 1,
    zero outside the 3-tap band (this also implements the W zero padding).
    """
    wk = jnp.transpose(w_oihw, (2, 3, 1, 0)).astype(jnp.float32)  # (ky,kx,ci,co)
    wi = jnp.arange(width)[:, None]
    wo = jnp.arange(width)[None, :]
    bands = []
    for ky in range(3):
        b = jnp.zeros((width * c, width * c), jnp.float32)
        for kx in range(3):
            sel = (wi - wo == kx - 1).astype(jnp.float32)         # (W, W)
            b = b + jnp.kron(sel, wk[ky, kx])
        bands.append(b)
    return jnp.concatenate(bands, axis=0).astype(jnp.bfloat16)    # (3*W*C, W*C)


def prepare_residual_block_params(w1, gamma1, beta1, w2, gamma2, beta2, width):
    """One-time (per weight set) preparation, kept OUT of the jitted forward."""
    c = w1.shape[0]
    return dict(
        b1=_stacked_band(w1, width, c),
        b2=_stacked_band(w2, width, c),
        g1=gamma1.reshape(1, c).astype(jnp.float32),
        be1=beta1.reshape(1, c).astype(jnp.float32),
        g2=gamma2.reshape(1, c).astype(jnp.float32),
        be2=beta2.reshape(1, c).astype(jnp.float32),
        fold=jnp.tile(jnp.eye(c, dtype=jnp.float32), (width, 1)),  # (W*C, C)
    )


@jax.jit
def residual_block_forward_nhwc(x_nhwc, params):
    """x_nhwc: (N, H, W, C) f32 -> (N, H, W, C) f32.  NHWC in/out, no transposes."""
    N, H, W, C = x_nhwc.shape
    x_rows = x_nhwc.astype(jnp.float32).reshape(N * H, W * C)     # free reshape

    vmem = pl.BlockSpec(memory_space=pltpu.MemorySpace.VMEM)
    kernel = functools.partial(_resblock_kernel, n=N, h=H, w=W, c=C)
    out_rows = pl.pallas_call(
        kernel,
        out_shape=jax.ShapeDtypeStruct((N * H, W * C), jnp.float32),
        in_specs=[vmem] * 8,
        out_specs=vmem,
    )(x_rows, params["b1"], params["g1"], params["be1"],
      params["b2"], params["g2"], params["be2"], params["fold"])

    return out_rows.reshape(N, H, W, C)                           # free reshape


# ----------------------------- pure-JAX reference -----------------------------
def _reference(x_nchw, w1, gamma1, beta1, w2, gamma2, beta2):
    def conv(x, w):
        return lax.conv_general_dilated(
            x, w, window_strides=(1, 1), padding=((1, 1), (1, 1)),
            dimension_numbers=("NCHW", "OIHW", "NCHW"))

    def bn(x, g, b):
        mean = jnp.mean(x, axis=(0, 2, 3), keepdims=True)
        var = jnp.mean((x - mean) ** 2, axis=(0, 2, 3), keepdims=True)
        return (x - mean) * lax.rsqrt(var + BN_EPS) * g.reshape(1, -1, 1, 1) \
            + b.reshape(1, -1, 1, 1)

    out = jax.nn.relu(bn(conv(x_nchw, w1), gamma1, beta1))
    out = bn(conv(out, w2), gamma2, beta2)
    out = out + x_nchw
    return jax.nn.relu(out)


if __name__ == "__main__":
    # stride == 1 and in_channels == out_channels (required by the forward).
    N, C, H, W = 2, 16, 16, 16
    key = jax.random.PRNGKey(0)
    kx, k1, k2 = jax.random.split(key, 3)

    x_nchw = jax.random.normal(kx, (N, C, H, W), dtype=jnp.float32)
    fan_in = C * 3 * 3
    w1 = jax.random.normal(k1, (C, C, 3, 3), dtype=jnp.float32) / jnp.sqrt(fan_in)
    w2 = jax.random.normal(k2, (C, C, 3, 3), dtype=jnp.float32) / jnp.sqrt(fan_in)
    # BatchNorm2d default affine init: weight=1, bias=0
    gamma1 = jnp.ones((C,), jnp.float32)
    beta1 = jnp.zeros((C,), jnp.float32)
    gamma2 = jnp.ones((C,), jnp.float32)
    beta2 = jnp.zeros((C,), jnp.float32)

    # One-time weight preparation, hoisted out of the per-step jitted forward.
    params = prepare_residual_block_params(w1, gamma1, beta1, w2, gamma2, beta2, W)

    # The kernel path runs NHWC end-to-end; this transpose is test-harness glue
    # only (the PyTorch spec / reference use NCHW).
    x_nhwc = jnp.transpose(x_nchw, (0, 2, 3, 1))
    out_nhwc = residual_block_forward_nhwc(x_nhwc, params)
    out_nhwc = jax.block_until_ready(out_nhwc)

    ref_nhwc = jnp.transpose(
        _reference(x_nchw, w1, gamma1, beta1, w2, gamma2, beta2), (0, 2, 3, 1))
    assert out_nhwc.shape == (N, H, W, C)
    err = float(jnp.max(jnp.abs(out_nhwc - ref_nhwc)))
    # bf16 MXU operands (f32 accumulation): tolerance loosened vs. pure-f32.
    assert jnp.allclose(out_nhwc, ref_nhwc, atol=6e-2, rtol=6e-2), err

    print("KERNEL_OK")
</pallas_src>

<mosaic_0001>
module attributes {stable_mosaic.version = 11 : i64} {
  func.func @_resblock_kernel(%arg0: memref<32x256xf32, #tpu.memory_space<vmem>>, %arg1: memref<768x256xbf16, #tpu.memory_space<vmem>>, %arg2: memref<1x16xf32, #tpu.memory_space<vmem>>, %arg3: memref<1x16xf32, #tpu.memory_space<vmem>>, %arg4: memref<768x256xbf16, #tpu.memory_space<vmem>>, %arg5: memref<1x16xf32, #tpu.memory_space<vmem>>, %arg6: memref<1x16xf32, #tpu.memory_space<vmem>>, %arg7: memref<256x16xf32, #tpu.memory_space<vmem>>, %arg8: memref<32x256xf32, #tpu.memory_space<vmem>>) attributes {dimension_semantics = [], scalar_prefetch = 0 : i64, scratch_operands = 0 : i64, tpu.core_type = #tpu.core_type<tc>} {
    %c0 = arith.constant 0 : index
    %c0_0 = arith.constant 0 : index
    %0 = vector.load %arg0[%c0, %c0_0] : memref<32x256xf32, #tpu.memory_space<vmem>>, vector<32x256xf32>
    %c0_1 = arith.constant 0 : index
    %c0_2 = arith.constant 0 : index
    %1 = vector.load %arg7[%c0_1, %c0_2] : memref<256x16xf32, #tpu.memory_space<vmem>>, vector<256x16xf32>
    %2 = tpu.iota {dimensions = array<i32: 0>} : vector<32x256xi32>
    %c16_i32 = arith.constant 16 : i32
    %c0_i32 = arith.constant 0 : i32
    %3 = arith.cmpi eq, %c16_i32, %c0_i32 : i32
    %c1_i32 = arith.constant 1 : i32
    %4 = arith.select %3, %c1_i32, %c16_i32 : i32
    %5 = vector.broadcast %4 : i32 to vector<32x256xi32>
    %6 = arith.remsi %2, %5 : vector<32x256xi32>
    %c0_i32_3 = arith.constant 0 : i32
    %7 = vector.broadcast %c0_i32_3 : i32 to vector<32x256xi32>
    %8 = arith.cmpi ne, %6, %7 : vector<32x256xi32>
    %c0_i32_4 = arith.constant 0 : i32
    %9 = vector.broadcast %c0_i32_4 : i32 to vector<32x256xi32>
    %10 = arith.cmpi slt, %6, %9 : vector<32x256xi32>
    %c0_i32_5 = arith.constant 0 : i32
    %11 = arith.cmpi slt, %4, %c0_i32_5 : i32
    %12 = vector.broadcast %11 : i1 to vector<32x256xi1>
    %13 = vector.broadcast %12 : vector<32x256xi1> to vector<32x256xi1>
    %14 = arith.xori %10, %13 : vector<32x256xi1>
    %15 = arith.andi %14, %8 : vector<32x256xi1>
    %16 = vector.broadcast %4 : i32 to vector<32x256xi32>
    %17 = arith.addi %6, %16 : vector<32x256xi32>
    %18 = arith.select %15, %17, %6 : vector<32x256xi1>, vector<32x256xi32>
    %c0_i32_6 = arith.constant 0 : i32
    %19 = vector.broadcast %c0_i32_6 : i32 to vector<32x256xi32>
    %20 = arith.cmpi ne, %18, %19 : vector<32x256xi32>
    %c15_i32 = arith.constant 15 : i32
    %21 = vector.broadcast %c15_i32 : i32 to vector<32x256xi32>
    %22 = arith.cmpi ne, %18, %21 : vector<32x256xi32>
    %c1_i32_7 = arith.constant 1 : i32
    %23 = tpu.dynamic_rotate %0 by %c1_i32_7 dim 0 : vector<32x256xf32>, i32 -> vector<32x256xf32>
    %cst = arith.constant 0.000000e+00 : f32
    %24 = vector.broadcast %cst : f32 to vector<32x256xf32>
    %25 = arith.select %20, %23, %24 : vector<32x256xi1>, vector<32x256xf32>
    %c31_i32 = arith.constant 31 : i32
    %26 = tpu.dynamic_rotate %0 by %c31_i32 dim 0 : vector<32x256xf32>, i32 -> vector<32x256xf32>
    %cst_8 = arith.constant 0.000000e+00 : f32
    %27 = vector.broadcast %cst_8 : f32 to vector<32x256xf32>
    %28 = arith.select %22, %26, %27 : vector<32x256xi1>, vector<32x256xf32>
    %29 = tpu.concatenate %25, %0, %28 in 1 : vector<32x256xf32>, vector<32x256xf32>, vector<32x256xf32> -> vector<32x768xf32>
    %30 = arith.truncf %29 : vector<32x768xf32> to vector<32x768xbf16>
    %c0_9 = arith.constant 0 : index
    %c0_10 = arith.constant 0 : index
    %31 = vector.load %arg1[%c0_9, %c0_10] : memref<768x256xbf16, #tpu.memory_space<vmem>>, vector<768x256xbf16>
    %cst_11 = arith.constant dense<0.000000e+00> : vector<32x256xf32>
    %32 = tpu.matmul %30, %31, %cst_11 {dimension_numbers = #tpu.dot_dimension_numbers<[1], [0], [0], [1], [0, 0, 1, 1], [], []>} : vector<32x768xbf16>, vector<768x256xbf16>, vector<32x256xf32> -> vector<32x256xf32>
    %c0_12 = arith.constant 0 : index
    %c0_13 = arith.constant 0 : index
    %33 = vector.load %arg2[%c0_12, %c0_13] : memref<1x16xf32, #tpu.memory_space<vmem>>, vector<1x16xf32>
    %c0_14 = arith.constant 0 : index
    %c0_15 = arith.constant 0 : index
    %34 = vector.load %arg3[%c0_14, %c0_15] : memref<1x16xf32, #tpu.memory_space<vmem>>, vector<1x16xf32>
    %cst_16 = arith.constant dense<0.000000e+00> : vector<256xf32>
    %35 = vector.multi_reduction <add>, %32, %cst_16 [0] : vector<32x256xf32> to vector<256xf32>
    %36 = vector.shape_cast %35 : vector<256xf32> to vector<1x256xf32>
    %37 = arith.mulf %32, %32 : vector<32x256xf32>
    %cst_17 = arith.constant dense<0.000000e+00> : vector<256xf32>
    %38 = vector.multi_reduction <add>, %37, %cst_17 [0] : vector<32x256xf32> to vector<256xf32>
    %39 = vector.shape_cast %38 : vector<256xf32> to vector<1x256xf32>
    %cst_18 = arith.constant dense<0.000000e+00> : vector<1x16xf32>
    %40 = tpu.matmul %36, %1, %cst_18 {dimension_numbers = #tpu.dot_dimension_numbers<[1], [0], [0], [1], [0, 0, 1, 1], [], []>} : vector<1x256xf32>, vector<256x16xf32>, vector<1x16xf32> -> vector<1x16xf32>
    %cst_19 = arith.constant dense<0.000000e+00> : vector<1x16xf32>
    %41 = tpu.matmul %39, %1, %cst_19 {dimension_numbers = #tpu.dot_dimension_numbers<[1], [0], [0], [1], [0, 0, 1, 1], [], []>} : vector<1x256xf32>, vector<256x16xf32>, vector<1x16xf32> -> vector<1x16xf32>
    %cst_20 = arith.constant 0.001953125 : f32
    %42 = vector.broadcast %cst_20 : f32 to vector<1x16xf32>
    %43 = arith.mulf %40, %42 : vector<1x16xf32>
    %cst_21 = arith.constant 0.001953125 : f32
    %44 = vector.broadcast %cst_21 : f32 to vector<1x16xf32>
    %45 = arith.mulf %41, %44 : vector<1x16xf32>
    %46 = arith.mulf %43, %43 : vector<1x16xf32>
    %47 = arith.subf %45, %46 : vector<1x16xf32>
    %cst_22 = arith.constant 9.99999974E-6 : f32
    %48 = vector.broadcast %cst_22 : f32 to vector<1x16xf32>
    %49 = arith.addf %47, %48 : vector<1x16xf32>
    %50 = math.rsqrt %49 : vector<1x16xf32>
    %51 = arith.mulf %33, %50 : vector<1x16xf32>
    %52 = arith.mulf %43, %51 : vector<1x16xf32>
    %53 = arith.subf %34, %52 : vector<1x16xf32>
    %54 = tpu.concatenate %51, %51, %51, %51, %51, %51, %51, %51, %51, %51, %51, %51, %51, %51, %51, %51 in 1 : vector<1x16xf32>, vector<1x16xf32>, vector<1x16xf32>, vector<1x16xf32>, vector<1x16xf32>, vector<1x16xf32>, vector<1x16xf32>, vector<1x16xf32>, vector<1x16xf32>, vector<1x16xf32>, vector<1x16xf32>, vector<1x16xf32>, vector<1x16xf32>, vector<1x16xf32>, vector<1x16xf32>, vector<1x16xf32> -> vector<1x256xf32>
    %55 = tpu.concatenate %53, %53, %53, %53, %53, %53, %53, %53, %53, %53, %53, %53, %53, %53, %53, %53 in 1 : vector<1x16xf32>, vector<1x16xf32>, vector<1x16xf32>, vector<1x16xf32>, vector<1x16xf32>, vector<1x16xf32>, vector<1x16xf32>, vector<1x16xf32>, vector<1x16xf32>, vector<1x16xf32>, vector<1x16xf32>, vector<1x16xf32>, vector<1x16xf32>, vector<1x16xf32>, vector<1x16xf32>, vector<1x16xf32> -> vector<1x256xf32>
    %56 = vector.broadcast %54 : vector<1x256xf32> to vector<32x256xf32>
    %57 = arith.mulf %32, %56 : vector<32x256xf32>
    %58 = vector.broadcast %55 : vector<1x256xf32> to vector<32x256xf32>
    %59 = arith.addf %57, %58 : vector<32x256xf32>
    %cst_23 = arith.constant 0.000000e+00 : f32
    %60 = vector.broadcast %cst_23 : f32 to vector<32x256xf32>
    %61 = arith.maximumf %59, %60 : vector<32x256xf32>
    %c1_i32_24 = arith.constant 1 : i32
    %62 = tpu.dynamic_rotate %61 by %c1_i32_24 dim 0 : vector<32x256xf32>, i32 -> vector<32x256xf32>
    %cst_25 = arith.constant 0.000000e+00 : f32
    %63 = vector.broadcast %cst_25 : f32 to vector<32x256xf32>
    %64 = arith.select %20, %62, %63 : vector<32x256xi1>, vector<32x256xf32>
    %c31_i32_26 = arith.constant 31 : i32
    %65 = tpu.dynamic_rotate %61 by %c31_i32_26 dim 0 : vector<32x256xf32>, i32 -> vector<32x256xf32>
    %cst_27 = arith.constant 0.000000e+00 : f32
    %66 = vector.broadcast %cst_27 : f32 to vector<32x256xf32>
    %67 = arith.select %22, %65, %66 : vector<32x256xi1>, vector<32x256xf32>
    %68 = tpu.concatenate %64, %61, %67 in 1 : vector<32x256xf32>, vector<32x256xf32>, vector<32x256xf32> -> vector<32x768xf32>
    %69 = arith.truncf %68 : vector<32x768xf32> to vector<32x768xbf16>
    %c0_28 = arith.constant 0 : index
    %c0_29 = arith.constant 0 : index
    %70 = vector.load %arg4[%c0_28, %c0_29] : memref<768x256xbf16, #tpu.memory_space<vmem>>, vector<768x256xbf16>
    %cst_30 = arith.constant dense<0.000000e+00> : vector<32x256xf32>
    %71 = tpu.matmul %69, %70, %cst_30 {dimension_numbers = #tpu.dot_dimension_numbers<[1], [0], [0], [1], [0, 0, 1, 1], [], []>} : vector<32x768xbf16>, vector<768x256xbf16>, vector<32x256xf32> -> vector<32x256xf32>
    %c0_31 = arith.constant 0 : index
    %c0_32 = arith.constant 0 : index
    %72 = vector.load %arg5[%c0_31, %c0_32] : memref<1x16xf32, #tpu.memory_space<vmem>>, vector<1x16xf32>
    %c0_33 = arith.constant 0 : index
    %c0_34 = arith.constant 0 : index
    %73 = vector.load %arg6[%c0_33, %c0_34] : memref<1x16xf32, #tpu.memory_space<vmem>>, vector<1x16xf32>
    %cst_35 = arith.constant dense<0.000000e+00> : vector<256xf32>
    %74 = vector.multi_reduction <add>, %71, %cst_35 [0] : vector<32x256xf32> to vector<256xf32>
    %75 = vector.shape_cast %74 : vector<256xf32> to vector<1x256xf32>
    %76 = arith.mulf %71, %71 : vector<32x256xf32>
    %cst_36 = arith.constant dense<0.000000e+00> : vector<256xf32>
    %77 = vector.multi_reduction <add>, %76, %cst_36 [0] : vector<32x256xf32> to vector<256xf32>
    %78 = vector.shape_cast %77 : vector<256xf32> to vector<1x256xf32>
    %cst_37 = arith.constant dense<0.000000e+00> : vector<1x16xf32>
    %79 = tpu.matmul %75, %1, %cst_37 {dimension_numbers = #tpu.dot_dimension_numbers<[1], [0], [0], [1], [0, 0, 1, 1], [], []>} : vector<1x256xf32>, vector<256x16xf32>, vector<1x16xf32> -> vector<1x16xf32>
    %cst_38 = arith.constant dense<0.000000e+00> : vector<1x16xf32>
    %80 = tpu.matmul %78, %1, %cst_38 {dimension_numbers = #tpu.dot_dimension_numbers<[1], [0], [0], [1], [0, 0, 1, 1], [], []>} : vector<1x256xf32>, vector<256x16xf32>, vector<1x16xf32> -> vector<1x16xf32>
    %cst_39 = arith.constant 0.001953125 : f32
    %81 = vector.broadcast %cst_39 : f32 to vector<1x16xf32>
    %82 = arith.mulf %79, %81 : vector<1x16xf32>
    %cst_40 = arith.constant 0.001953125 : f32
    %83 = vector.broadcast %cst_40 : f32 to vector<1x16xf32>
    %84 = arith.mulf %80, %83 : vector<1x16xf32>
    %85 = arith.mulf %82, %82 : vector<1x16xf32>
    %86 = arith.subf %84, %85 : vector<1x16xf32>
    %cst_41 = arith.constant 9.99999974E-6 : f32
    %87 = vector.broadcast %cst_41 : f32 to vector<1x16xf32>
    %88 = arith.addf %86, %87 : vector<1x16xf32>
    %89 = math.rsqrt %88 : vector<1x16xf32>
    %90 = arith.mulf %72, %89 : vector<1x16xf32>
    %91 = arith.mulf %82, %90 : vector<1x16xf32>
    %92 = arith.subf %73, %91 : vector<1x16xf32>
    %93 = tpu.concatenate %90, %90, %90, %90, %90, %90, %90, %90, %90, %90, %90, %90, %90, %90, %90, %90 in 1 : vector<1x16xf32>, vector<1x16xf32>, vector<1x16xf32>, vector<1x16xf32>, vector<1x16xf32>, vector<1x16xf32>, vector<1x16xf32>, vector<1x16xf32>, vector<1x16xf32>, vector<1x16xf32>, vector<1x16xf32>, vector<1x16xf32>, vector<1x16xf32>, vector<1x16xf32>, vector<1x16xf32>, vector<1x16xf32> -> vector<1x256xf32>
    %94 = tpu.concatenate %92, %92, %92, %92, %92, %92, %92, %92, %92, %92, %92, %92, %92, %92, %92, %92 in 1 : vector<1x16xf32>, vector<1x16xf32>, vector<1x16xf32>, vector<1x16xf32>, vector<1x16xf32>, vector<1x16xf32>, vector<1x16xf32>, vector<1x16xf32>, vector<1x16xf32>, vector<1x16xf32>, vector<1x16xf32>, vector<1x16xf32>, vector<1x16xf32>, vector<1x16xf32>, vector<1x16xf32>, vector<1x16xf32> -> vector<1x256xf32>
    %95 = vector.broadcast %93 : vector<1x256xf32> to vector<32x256xf32>
    %96 = arith.mulf %71, %95 : vector<32x256xf32>
    %97 = vector.broadcast %94 : vector<1x256xf32> to vector<32x256xf32>
    %98 = arith.addf %96, %97 : vector<32x256xf32>
    %99 = arith.addf %98, %0 : vector<32x256xf32>
    %cst_42 = arith.constant 0.000000e+00 : f32
    %100 = vector.broadcast %cst_42 : f32 to vector<32x256xf32>
    %101 = arith.maximumf %99, %100 : vector<32x256xf32>
    %c0_43 = arith.constant 0 : index
    %c0_44 = arith.constant 0 : index
    %102 = vector.load %arg8[%c0_43, %c0_44] : memref<32x256xf32, #tpu.memory_space<vmem>>, vector<32x256xf32>
    tpu.vector_store %arg8[%c0_43, %c0_44], %101 {strides = array<i32>} : memref<32x256xf32, #tpu.memory_space<vmem>>, vector<32x256xf32>,
    return
  }
}

</mosaic_0001>

<llo_original>
// kernel: residual_block_forward_nhwc.1
$region0: #{residual_block_forward_nhwc.1}
  #allocation0 [shape = 'u32[]', space=smem, size = 0x4, offset = 0x4, fixed_abs, tag = 'smem constant byte address 0x4 - core index']
  #allocation1 [shape = 'u32[72,128]{1,0:T(1,128)}', space=vmem, size = 0x9000, scoped, tag = 'internal scratch']
  %s0 = inlined_call_operand.vmem [shape: f32[32,256], index: 0, kind: input, shape index: {}]
  %s1 = inlined_call_operand.vmem [shape: bf16[768,256], index: 1, kind: input, shape index: {}]
  %s2 = inlined_call_operand.vmem [shape: f32[1,16], index: 2, kind: input, shape index: {}]
  %s3 = inlined_call_operand.vmem [shape: f32[1,16], index: 3, kind: input, shape index: {}]
  %s4 = inlined_call_operand.hbm [shape: bf16[768,256], index: 4, kind: input, shape index: {}]
  %s5 = inlined_call_operand.vmem [shape: f32[1,16], index: 5, kind: input, shape index: {}]
  %s6 = inlined_call_operand.vmem [shape: f32[1,16], index: 6, kind: input, shape index: {}]
  %s7 = inlined_call_operand.vmem [shape: f32[256,16], index: 7, kind: input, shape index: {}]
  %s8 = inlined_call_operand.vmem [shape: f32[32,256], index: 8, kind: output, shape index: {}]
  %s9 = sld [smem:[#allocation0]]
  $region46: #{residual_block_forward_nhwc.1} parent=0
    _
  %s11 = ssub.s32 1, %s9
  %s12 = scalar_select 0, %s11, %s9
  $region1: #{residual_block_forward_nhwc.1} parent=0
    #allocation2 [shape = 'u8[393216]{0}', space=vmem, size = 0x60000, scoped, tag = 'input window, operand 4, single buffered']
    #allocation3 [shape = 's32[1]{0}', space=sflag, size = 0x4, scoped, tag = 'scoped memory for residual_block_forward_nhwc.1']
    %13 = vsyncpa [#allocation3], 0
    // Predicated region
    $region2: #{residual_block_forward_nhwc.1} parent=1 // pred_check
      _
    $region3: #{residual_block_forward_nhwc.1} parent=1 // pred_check_branch
      %15 = sbr.rel (0) target = $region5
    $region4: #{residual_block_forward_nhwc.1} parent=1 // pred_region
      _
    $region5: #{residual_block_forward_nhwc.1} parent=1 // pred_fallthru
      _
    // Predicated region
    $region6: #{residual_block_forward_nhwc.1} parent=1 // pred_check
      _
    $region7: #{residual_block_forward_nhwc.1} parent=1 // pred_check_branch
      %17 = sbr.rel (0) target = $region9
    $region8: #{residual_block_forward_nhwc.1} parent=1 // pred_region
      _
    $region9: #{residual_block_forward_nhwc.1} parent=1 // pred_fallthru
      _
    // Predicated region
    $region10: #{residual_block_forward_nhwc.1} parent=1 // pred_check
      _
    $region11: #{residual_block_forward_nhwc.1} parent=1 // pred_check_branch
      %19 = sbr.rel (0) target = $region13
    $region12: #{residual_block_forward_nhwc.1} parent=1 // pred_region
      _
    $region13: #{residual_block_forward_nhwc.1} parent=1 // pred_fallthru
      _
    // Predicated region
    $region14: #{residual_block_forward_nhwc.1} parent=1 // pred_check
      _
    $region15: #{residual_block_forward_nhwc.1} parent=1 // pred_check_branch
      %21 = sbr.rel (0) target = $region17
    $region16: #{residual_block_forward_nhwc.1} parent=1 // pred_region
      _
    $region17: #{residual_block_forward_nhwc.1} parent=1 // pred_fallthru
      _
    // Predicated region
    $region18: #{residual_block_forward_nhwc.1} parent=1 // pred_check
      _
    $region19: #{residual_block_forward_nhwc.1} parent=1 // pred_check_branch
      %23 = sbr.rel (0) target = $region21
    $region20: #{residual_block_forward_nhwc.1} parent=1 // pred_region
      %25 = vsyncadd [#allocation3], 0
      %s26 = sshll.u32 %s4, 4
      %s27 = int_to_ptr.hbm [resolvable:$true] %s26
      %s28 = sshll.u32 [#allocation2], 4
      %s29 = int_to_ptr.vmem [resolvable:$true] %s28
      %34 = dma.hbm_to_vmem [thread:$0]  %s27, 12288, %s29, [#allocation3], 128, 128, 8
    $region21: #{residual_block_forward_nhwc.1} parent=1 // pred_fallthru
      _
    // Predicated region
    $region22: #{residual_block_forward_nhwc.1} parent=1 // pred_check
      _
    $region23: #{residual_block_forward_nhwc.1} parent=1 // pred_check_branch
      %36 = sbr.rel (0) target = $region25
    $region24: #{residual_block_forward_nhwc.1} parent=1 // pred_region
      _
    $region25: #{residual_block_forward_nhwc.1} parent=1 // pred_fallthru
      _
    // Predicated region
    $region26: #{residual_block_forward_nhwc.1} parent=1 // pred_check
      _
    $region27: #{residual_block_forward_nhwc.1} parent=1 // pred_check_branch
      %38 = sbr.rel (0) target = $region29
    $region28: #{residual_block_forward_nhwc.1} parent=1 // pred_region
      _
    $region29: #{residual_block_forward_nhwc.1} parent=1 // pred_fallthru
      _
    // Predicated region
    $region30: #{residual_block_forward_nhwc.1} parent=1 // pred_check
      _
    $region31: #{residual_block_forward_nhwc.1} parent=1 // pred_check_branch
      %40 = sbr.rel (0) target = $region33
    $region32: #{residual_block_forward_nhwc.1} parent=1 // pred_region
      _
    $region33: #{residual_block_forward_nhwc.1} parent=1 // pred_fallthru
      _
    // Predicated region
    $region34: #{residual_block_forward_nhwc.1} parent=1 // pred_check
      _
    $region35: #{residual_block_forward_nhwc.1} parent=1 // pred_check_branch
      %42 = sbr.rel (0) target = $region37
    $region36: #{residual_block_forward_nhwc.1} parent=1 // pred_region
      %44 = dma.done [#allocation3], 12288
    $region37: #{residual_block_forward_nhwc.1} parent=1 // pred_fallthru
      _
    %v45 = vld [vmem:[%s0] sm:$0xff]
    %v46 = vld [vmem:[%s0 + $0x8] sm:$0xff]
    %v47 = vld [vmem:[%s0 + $0x10] sm:$0xff]
    %v48 = vld [vmem:[%s0 + $0x18] sm:$0xff]
    %v49 = vld [vmem:[%s0 + $0x20] sm:$0xff]
    %v50 = vld [vmem:[%s0 + $0x28] sm:$0xff]
    %v51 = vld [vmem:[%s0 + $0x30] sm:$0xff]
    %v52 = vld [vmem:[%s0 + $0x38] sm:$0xff]
    %v53 = vld [vmem:[%s7] sm:$0xff]
    %v54 = vld [vmem:[%s7 + $0x8] sm:$0xff]
    %v55 = vld [vmem:[%s7 + $0x10] sm:$0xff]
    %v56 = vld [vmem:[%s7 + $0x18] sm:$0xff]
    %v57 = vld [vmem:[%s7 + $0x20] sm:$0xff]
    %v58 = vld [vmem:[%s7 + $0x28] sm:$0xff]
    %v59 = vld [vmem:[%s7 + $0x30] sm:$0xff]
    %v60 = vld [vmem:[%s7 + $0x38] sm:$0xff]
    %v61 = vld [vmem:[%s7 + $0x40] sm:$0xff]
    %v62 = vld [vmem:[%s7 + $0x48] sm:$0xff]
    %v63 = vld [vmem:[%s7 + $0x50] sm:$0xff]
    %v64 = vld [vmem:[%s7 + $0x58] sm:$0xff]
    %v65 = vld [vmem:[%s7 + $0x60] sm:$0xff]
    %v66 = vld [vmem:[%s7 + $0x68] sm:$0xff]
    %v67 = vld [vmem:[%s7 + $0x70] sm:$0xff]
    %v68 = vld [vmem:[%s7 + $0x78] sm:$0xff]
    %v69 = vld [vmem:[%s7 + $0x80] sm:$0xff]
    %v70 = vld [vmem:[%s7 + $0x88] sm:$0xff]
    %v71 = vld [vmem:[%s7 + $0x90] sm:$0xff]
    %v72 = vld [vmem:[%s7 + $0x98] sm:$0xff]
    %v73 = vld [vmem:[%s7 + $0xa0] sm:$0xff]
    %v74 = vld [vmem:[%s7 + $0xa8] sm:$0xff]
    %v75 = vld [vmem:[%s7 + $0xb0] sm:$0xff]
    %v76 = vld [vmem:[%s7 + $0xb8] sm:$0xff]
    %v77 = vld [vmem:[%s7 + $0xc0] sm:$0xff]
    %v78 = vld [vmem:[%s7 + $0xc8] sm:$0xff]
    %v79 = vld [vmem:[%s7 + $0xd0] sm:$0xff]
    %v80 = vld [vmem:[%s7 + $0xd8] sm:$0xff]
    %v81 = vld [vmem:[%s7 + $0xe0] sm:$0xff]
    %v82 = vld [vmem:[%s7 + $0xe8] sm:$0xff]
    %v83 = vld [vmem:[%s7 + $0xf0] sm:$0xff]
    %v84 = vld [vmem:[%s7 + $0xf8] sm:$0xff]
    %v85 = vlaneseq
    %v86 = vshrl.u32 %v85, 7
    %v87 = vadd.s32 %v86, 8
    %v88 = vadd.s32 %v86, 16
    %v89 = vadd.s32 %v86, 24
    %vm90 = vcmp.lt.s32.totalorder %v86, 0
    %v91 = vsub.s32 0, %v86
    %v92 = vsel %vm90, %v91, %v86
    %v93 = vshrl.u32 %v92, 4
    %v94 = vand.u32 %v92, 15
    %v95 = vsub.s32 0, %v94
    %v96 = vsel %vm90, %v95, %v94
    %vm97 = vcmp.lt.s32.totalorder %v87, 0
    %v98 = vsub.s32 0, %v87
    %v99 = vsel %vm97, %v98, %v87
    %v100 = vshrl.u32 %v99, 4
    %v101 = vand.u32 %v99, 15
    %v102 = vsub.s32 0, %v101
    %v103 = vsel %vm97, %v102, %v101
    %vm104 = vcmp.lt.s32.totalorder %v88, 0
    %v105 = vsub.s32 0, %v88
    %v106 = vsel %vm104, %v105, %v88
    %v107 = vshrl.u32 %v106, 4
    %v108 = vand.u32 %v106, 15
    %v109 = vsub.s32 0, %v108
    %v110 = vsel %vm104, %v109, %v108
    %vm111 = vcmp.lt.s32.totalorder %v89, 0
    %v112 = vsub.s32 0, %v89
    %v113 = vsel %vm111, %v112, %v89
    %v114 = vshrl.u32 %v113, 4
    %v115 = vand.u32 %v113, 15
    %v116 = vsub.s32 0, %v115
    %v117 = vsel %vm111, %v116, %v115
    %vm118 = vcmp.ne.s32.totalorder %v96, 0
    %vm119 = vcmp.ne.s32.totalorder %v103, 0
    %vm120 = vcmp.ne.s32.totalorder %v110, 0
    %vm121 = vcmp.ne.s32.totalorder %v117, 0
    %vm122 = vcmp.lt.s32.totalorder %v96, 0
    %vm123 = vcmp.lt.s32.totalorder %v103, 0
    %vm124 = vcmp.lt.s32.totalorder %v110, 0
    %vm125 = vcmp.lt.s32.totalorder %v117, 0
    %vm126 = vmand %vm122, %vm118
    %vm127 = vmand %vm123, %vm119
    %vm128 = vmand %vm124, %vm120
    %vm129 = vmand %vm125, %vm121
    %v130 = vadd.s32 %v96, 16
    %v131 = vadd.s32 %v103, 16
    %v132 = vadd.s32 %v110, 16
    %v133 = vadd.s32 %v117, 16
    %v134 = vsel %vm126, %v130, %v96
    %v135 = vsel %vm127, %v131, %v103
    %v136 = vsel %vm128, %v132, %v110
    %v137 = vsel %vm129, %v133, %v117
    %vm138 = vcmp.ne.s32.totalorder %v134, 0
    %vm139 = vcmp.ne.s32.totalorder %v135, 0
    %vm140 = vcmp.ne.s32.totalorder %v136, 0
    %vm141 = vcmp.ne.s32.totalorder %v137, 0
    %vm142 = vcmp.ne.s32.totalorder %v134, 15
    %vm143 = vcmp.ne.s32.totalorder %v135, 15
    %vm144 = vcmp.ne.s32.totalorder %v136, 15
    %vm145 = vcmp.ne.s32.totalorder %v137, 15
    %v146 = vrot.slane %v45, 7
    %v147 = vrot.slane %v46, 7
    %v148 = vrot.slane %v47, 7
    %v149 = vrot.slane %v48, 7
    %v150 = vrot.slane %v49, 7
    %v151 = vrot.slane %v50, 7
    %v152 = vrot.slane %v51, 7
    %v153 = vrot.slane %v52, 7
    %vm154 = vcmp.lt.s32.totalorder %v86, 1
    %v155 = vsel %vm154, %v150, %v152
    %v156 = vsel %vm154, %v151, %v153
    %v157 = vsel %vm154, %v148, %v150
    %v158 = vsel %vm154, %v149, %v151
    %v159 = vsel %vm154, %v146, %v148
    %v160 = vsel %vm154, %v147, %v149
    %v161 = vsel %vm154, %v152, %v146
    %v162 = vsel %vm154, %v153, %v147
    %v163 = vsel %vm138, %v161, 0.0
    %v164 = vsel %vm138, %v162, 0.0
    %v165 = vsel %vm139, %v159, 0.0
    %v166 = vsel %vm139, %v160, 0.0
    %v167 = vsel %vm140, %v157, 0.0
    %v168 = vsel %vm140, %v158, 0.0
    %v169 = vsel %vm141, %v155, 0.0
    %v170 = vsel %vm141, %v156, 0.0
    %v171 = vrot.slane %v45, 1
    %v172 = vrot.slane %v46, 1
    %v173 = vrot.slane %v47, 1
    %v174 = vrot.slane %v48, 1
    %v175 = vrot.slane %v49, 1
    %v176 = vrot.slane %v50, 1
    %v177 = vrot.slane %v51, 1
    %v178 = vrot.slane %v52, 1
    %vm179 = vcmp.lt.s32.totalorder %v86, 7
    %v180 = vsel %vm179, %v175, %v177
    %v181 = vsel %vm179, %v176, %v178
    %v182 = vsel %vm179, %v173, %v175
    %v183 = vsel %vm179, %v174, %v176
    %v184 = vsel %vm179, %v171, %v173
    %v185 = vsel %vm179, %v172, %v174
    %v186 = vsel %vm179, %v177, %v171
    %v187 = vsel %vm179, %v178, %v172
    %v188 = vsel %vm142, %v184, 0.0
    %v189 = vsel %vm142, %v185, 0.0
    %v190 = vsel %vm143, %v182, 0.0
    %v191 = vsel %vm143, %v183, 0.0
    %v192 = vsel %vm144, %v180, 0.0
    %v193 = vsel %vm144, %v181, 0.0
    %v194 = vsel %vm145, %v186, 0.0
    %v195 = vsel %vm145, %v187, 0.0
    %v196 = vpack.c.bf16 %v165, %v163
    %v197 = vpack.c.bf16 %v166, %v164
    %v198 = vpack.c.bf16 %v47, %v45
    %v199 = vpack.c.bf16 %v48, %v46
    %v200 = vpack.c.bf16 %v190, %v188
    %v201 = vpack.c.bf16 %v191, %v189
    %v202 = vpack.c.bf16 %v169, %v167
    %v203 = vpack.c.bf16 %v170, %v168
    %v204 = vpack.c.bf16 %v51, %v49
    %v205 = vpack.c.bf16 %v52, %v50
    %v206 = vpack.c.bf16 %v194, %v192
    %v207 = vpack.c.bf16 %v195, %v193
    %v208 = vld [vmem:[%s1] sm:$0xff]
    %v209 = vld [vmem:[%s1 + $0x8] sm:$0xff]
    %v210 = vld [vmem:[%s1 + $0x10] sm:$0xff]
    %v211 = vld [vmem:[%s1 + $0x18] sm:$0xff]
    %v212 = vld [vmem:[%s1 + $0x20] sm:$0xff]
    %v213 = vld [vmem:[%s1 + $0x28] sm:$0xff]
    %v214 = vld [vmem:[%s1 + $0x30] sm:$0xff]
    %v215 = vld [vmem:[%s1 + $0x38] sm:$0xff]
    %v216 = vld [vmem:[%s1 + $0x40] sm:$0xff]
    %v217 = vld [vmem:[%s1 + $0x48] sm:$0xff]
    %v218 = vld [vmem:[%s1 + $0x50] sm:$0xff]
    %v219 = vld [vmem:[%s1 + $0x58] sm:$0xff]
    %v220 = vld [vmem:[%s1 + $0x60] sm:$0xff]
    %v221 = vld [vmem:[%s1 + $0x68] sm:$0xff]
    %v222 = vld [vmem:[%s1 + $0x70] sm:$0xff]
    %v223 = vld [vmem:[%s1 + $0x78] sm:$0xff]
    %v224 = vld [vmem:[%s1 + $0x80] sm:$0xff]
    %v225 = vld [vmem:[%s1 + $0x88] sm:$0xff]
    %v226 = vld [vmem:[%s1 + $0x90] sm:$0xff]
    %v227 = vld [vmem:[%s1 + $0x98] sm:$0xff]
    %v228 = vld [vmem:[%s1 + $0xa0] sm:$0xff]
    %v229 = vld [vmem:[%s1 + $0xa8] sm:$0xff]
    %v230 = vld [vmem:[%s1 + $0xb0] sm:$0xff]
    %v231 = vld [vmem:[%s1 + $0xb8] sm:$0xff]
    %v232 = vld [vmem:[%s1 + $0xc0] sm:$0xff]
    %v233 = vld [vmem:[%s1 + $0xc8] sm:$0xff]
    %v234 = vld [vmem:[%s1 + $0xd0] sm:$0xff]
    %v235 = vld [vmem:[%s1 + $0xd8] sm:$0xff]
    %v236 = vld [vmem:[%s1 + $0xe0] sm:$0xff]
    %v237 = vld [vmem:[%s1 + $0xe8] sm:$0xff]
    %v238 = vld [vmem:[%s1 + $0xf0] sm:$0xff]
    %v239 = vld [vmem:[%s1 + $0xf8] sm:$0xff]
    %v240 = vld [vmem:[%s1 + $0x100] sm:$0xff]
    %v241 = vld [vmem:[%s1 + $0x108] sm:$0xff]
    %v242 = vld [vmem:[%s1 + $0x110] sm:$0xff]
    %v243 = vld [vmem:[%s1 + $0x118] sm:$0xff]
    %v244 = vld [vmem:[%s1 + $0x120] sm:$0xff]
    %v245 = vld [vmem:[%s1 + $0x128] sm:$0xff]
    %v246 = vld [vmem:[%s1 + $0x130] sm:$0xff]
    %v247 = vld [vmem:[%s1 + $0x138] sm:$0xff]
    %v248 = vld [vmem:[%s1 + $0x140] sm:$0xff]
    %v249 = vld [vmem:[%s1 + $0x148] sm:$0xff]
    %v250 = vld [vmem:[%s1 + $0x150] sm:$0xff]
    %v251 = vld [vmem:[%s1 + $0x158] sm:$0xff]
    %v252 = vld [vmem:[%s1 + $0x160] sm:$0xff]
    %v253 = vld [vmem:[%s1 + $0x168] sm:$0xff]
    %v254 = vld [vmem:[%s1 + $0x170] sm:$0xff]
    %v255 = vld [vmem:[%s1 + $0x178] sm:$0xff]
    %v256 = vld [vmem:[%s1 + $0x180] sm:$0xff]
    %v257 = vld [vmem:[%s1 + $0x188] sm:$0xff]
    %v258 = vld [vmem:[%s1 + $0x190] sm:$0xff]
    %v259 = vld [vmem:[%s1 + $0x198] sm:$0xff]
    %v260 = vld [vmem:[%s1 + $0x1a0] sm:$0xff]
    %v261 = vld [vmem:[%s1 + $0x1a8] sm:$0xff]
    %v262 = vld [vmem:[%s1 + $0x1b0] sm:$0xff]
    %v263 = vld [vmem:[%s1 + $0x1b8] sm:$0xff]
    %v264 = vld [vmem:[%s1 + $0x1c0] sm:$0xff]
    %v265 = vld [vmem:[%s1 + $0x1c8] sm:$0xff]
    %v266 = vld [vmem:[%s1 + $0x1d0] sm:$0xff]
    %v267 = vld [vmem:[%s1 + $0x1d8] sm:$0xff]
    %v268 = vld [vmem:[%s1 + $0x1e0] sm:$0xff]
    %v269 = vld [vmem:[%s1 + $0x1e8] sm:$0xff]
    %v270 = vld [vmem:[%s1 + $0x1f0] sm:$0xff]
    %v271 = vld [vmem:[%s1 + $0x1f8] sm:$0xff]
    %v272 = vld [vmem:[%s1 + $0x200] sm:$0xff]
    %v273 = vld [vmem:[%s1 + $0x208] sm:$0xff]
    %v274 = vld [vmem:[%s1 + $0x210] sm:$0xff]
    %v275 = vld [vmem:[%s1 + $0x218] sm:$0xff]
    %v276 = vld [vmem:[%s1 + $0x220] sm:$0xff]
    %v277 = vld [vmem:[%s1 + $0x228] sm:$0xff]
    %v278 = vld [vmem:[%s1 + $0x230] sm:$0xff]
    %v279 = vld [vmem:[%s1 + $0x238] sm:$0xff]
    %v280 = vld [vmem:[%s1 + $0x240] sm:$0xff]
    %v281 = vld [vmem:[%s1 + $0x248] sm:$0xff]
    %v282 = vld [vmem:[%s1 + $0x250] sm:$0xff]
    %v283 = vld [vmem:[%s1 + $0x258] sm:$0xff]
    %v284 = vld [vmem:[%s1 + $0x260] sm:$0xff]
    %v285 = vld [vmem:[%s1 + $0x268] sm:$0xff]
    %v286 = vld [vmem:[%s1 + $0x270] sm:$0xff]
    %v287 = vld [vmem:[%s1 + $0x278] sm:$0xff]
    %v288 = vld [vmem:[%s1 + $0x280] sm:$0xff]
    %v289 = vld [vmem:[%s1 + $0x288] sm:$0xff]
    %v290 = vld [vmem:[%s1 + $0x290] sm:$0xff]
    %v291 = vld [vmem:[%s1 + $0x298] sm:$0xff]
    %v292 = vld [vmem:[%s1 + $0x2a0] sm:$0xff]
    %v293 = vld [vmem:[%s1 + $0x2a8] sm:$0xff]
    %v294 = vld [vmem:[%s1 + $0x2b0] sm:$0xff]
    %v295 = vld [vmem:[%s1 + $0x2b8] sm:$0xff]
    %v296 = vld [vmem:[%s1 + $0x2c0] sm:$0xff]
    %v297 = vld [vmem:[%s1 + $0x2c8] sm:$0xff]
    %v298 = vld [vmem:[%s1 + $0x2d0] sm:$0xff]
    %v299 = vld [vmem:[%s1 + $0x2d8] sm:$0xff]
    %v300 = vld [vmem:[%s1 + $0x2e0] sm:$0xff]
    %v301 = vld [vmem:[%s1 + $0x2e8] sm:$0xff]
    %v302 = vld [vmem:[%s1 + $0x2f0] sm:$0xff]
    %v303 = vld [vmem:[%s1 + $0x2f8] sm:$0xff]
    %v400 = vunpack.c.l.b16 %v208
    %v401 = vunpack.c.h.b16 %v208
    %v402 = vunpack.c.l.b16 %v209
    %v403 = vunpack.c.h.b16 %v209
    %v404 = vunpack.c.l.b16 %v210
    %v405 = vunpack.c.h.b16 %v210
    %v406 = vunpack.c.l.b16 %v211
    %v407 = vunpack.c.h.b16 %v211
    %v408 = vunpack.c.l.b16 %v212
    %v409 = vunpack.c.h.b16 %v212
    %v410 = vunpack.c.l.b16 %v213
    %v411 = vunpack.c.h.b16 %v213
    %v412 = vunpack.c.l.b16 %v214
    %v413 = vunpack.c.h.b16 %v214
    %v414 = vunpack.c.l.b16 %v215
    %v415 = vunpack.c.h.b16 %v215
    %v416 = vunpack.c.l.b16 %v216
    %v417 = vunpack.c.h.b16 %v216
    %v418 = vunpack.c.l.b16 %v217
    %v419 = vunpack.c.h.b16 %v217
    %v420 = vunpack.c.l.b16 %v218
    %v421 = vunpack.c.h.b16 %v218
    %v422 = vunpack.c.l.b16 %v219
    %v423 = vunpack.c.h.b16 %v219
    %v424 = vunpack.c.l.b16 %v220
    %v425 = vunpack.c.h.b16 %v220
    %v426 = vunpack.c.l.b16 %v221
    %v427 = vunpack.c.h.b16 %v221
    %v428 = vunpack.c.l.b16 %v222
    %v429 = vunpack.c.h.b16 %v222
    %v430 = vunpack.c.l.b16 %v223
    %v431 = vunpack.c.h.b16 %v223
    %v432 = vunpack.c.l.b16 %v224
    %v433 = vunpack.c.h.b16 %v224
    %v434 = vunpack.c.l.b16 %v225
    %v435 = vunpack.c.h.b16 %v225
    %v436 = vunpack.c.l.b16 %v226
    %v437 = vunpack.c.h.b16 %v226
    %v438 = vunpack.c.l.b16 %v227
    %v439 = vunpack.c.h.b16 %v227
    %v440 = vunpack.c.l.b16 %v228
    %v441 = vunpack.c.h.b16 %v228
    %v442 = vunpack.c.l.b16 %v229
    %v443 = vunpack.c.h.b16 %v229
    %v444 = vunpack.c.l.b16 %v230
    %v445 = vunpack.c.h.b16 %v230
    %v446 = vunpack.c.l.b16 %v231
    %v447 = vunpack.c.h.b16 %v231
    %v448 = vunpack.c.l.b16 %v232
    %v449 = vunpack.c.h.b16 %v232
    %v450 = vunpack.c.l.b16 %v233
    %v451 = vunpack.c.h.b16 %v233
    %v452 = vunpack.c.l.b16 %v234
    %v453 = vunpack.c.h.b16 %v234
    %v454 = vunpack.c.l.b16 %v235
    %v455 = vunpack.c.h.b16 %v235
    %v456 = vunpack.c.l.b16 %v236
    %v457 = vunpack.c.h.b16 %v236
    %v458 = vunpack.c.l.b16 %v237
    %v459 = vunpack.c.h.b16 %v237
    %v460 = vunpack.c.l.b16 %v238
    %v461 = vunpack.c.h.b16 %v238
    %v462 = vunpack.c.l.b16 %v239
    %v463 = vunpack.c.h.b16 %v239
    %v464 = vunpack.c.l.b16 %v240
    %v465 = vunpack.c.h.b16 %v240
    %v466 = vunpack.c.l.b16 %v241
    %v467 = vunpack.c.h.b16 %v241
    %v468 = vunpack.c.l.b16 %v242
    %v469 = vunpack.c.h.b16 %v242
    %v470 = vunpack.c.l.b16 %v243
    %v471 = vunpack.c.h.b16 %v243
    %v472 = vunpack.c.l.b16 %v244
    %v473 = vunpack.c.h.b16 %v244
    %v474 = vunpack.c.l.b16 %v245
    %v475 = vunpack.c.h.b16 %v245
    %v476 = vunpack.c.l.b16 %v246
    %v477 = vunpack.c.h.b16 %v246
    %v478 = vunpack.c.l.b16 %v247
    %v479 = vunpack.c.h.b16 %v247
    %v480 = vunpack.c.l.b16 %v248
    %v481 = vunpack.c.h.b16 %v248
    %v482 = vunpack.c.l.b16 %v249
    %v483 = vunpack.c.h.b16 %v249
    %v484 = vunpack.c.l.b16 %v250
    %v485 = vunpack.c.h.b16 %v250
    %v486 = vunpack.c.l.b16 %v251
    %v487 = vunpack.c.h.b16 %v251
    %v488 = vunpack.c.l.b16 %v252
    %v489 = vunpack.c.h.b16 %v252
    %v490 = vunpack.c.l.b16 %v253
    %v491 = vunpack.c.h.b16 %v253
    %v492 = vunpack.c.l.b16 %v254
    %v493 = vunpack.c.h.b16 %v254
    %v494 = vunpack.c.l.b16 %v255
    %v495 = vunpack.c.h.b16 %v255
    %v496 = vunpack.c.l.b16 %v256
    %v497 = vunpack.c.h.b16 %v256
    %v498 = vunpack.c.l.b16 %v257
    %v499 = vunpack.c.h.b16 %v257
    %v500 = vunpack.c.l.b16 %v258
    %v501 = vunpack.c.h.b16 %v258
    %v502 = vunpack.c.l.b16 %v259
    %v503 = vunpack.c.h.b16 %v259
    %v504 = vunpack.c.l.b16 %v260
    %v505 = vunpack.c.h.b16 %v260
    %v506 = vunpack.c.l.b16 %v261
    %v507 = vunpack.c.h.b16 %v261
    %v508 = vunpack.c.l.b16 %v262
    %v509 = vunpack.c.h.b16 %v262
    %v510 = vunpack.c.l.b16 %v263
    %v511 = vunpack.c.h.b16 %v263
    %v512 = vunpack.c.l.b16 %v264
    %v513 = vunpack.c.h.b16 %v264
    %v514 = vunpack.c.l.b16 %v265
    %v515 = vunpack.c.h.b16 %v265
    %v516 = vunpack.c.l.b16 %v266
    %v517 = vunpack.c.h.b16 %v266
    %v518 = vunpack.c.l.b16 %v267
    %v519 = vunpack.c.h.b16 %v267
    %v520 = vunpack.c.l.b16 %v268
    %v521 = vunpack.c.h.b16 %v268
    %v522 = vunpack.c.l.b16 %v269
    %v523 = vunpack.c.h.b16 %v269
    %v524 = vunpack.c.l.b16 %v270
    %v525 = vunpack.c.h.b16 %v270
    %v526 = vunpack.c.l.b16 %v271
    %v527 = vunpack.c.h.b16 %v271
    %v528 = vunpack.c.l.b16 %v272
    %v529 = vunpack.c.h.b16 %v272
    %v530 = vunpack.c.l.b16 %v273
    %v531 = vunpack.c.h.b16 %v273
    %v532 = vunpack.c.l.b16 %v274
    %v533 = vunpack.c.h.b16 %v274
    %v534 = vunpack.c.l.b16 %v275
    %v535 = vunpack.c.h.b16 %v275
    %v536 = vunpack.c.l.b16 %v276
    %v537 = vunpack.c.h.b16 %v276
    %v538 = vunpack.c.l.b16 %v277
    %v539 = vunpack.c.h.b16 %v277
    %v540 = vunpack.c.l.b16 %v278
    %v541 = vunpack.c.h.b16 %v278
    %v542 = vunpack.c.l.b16 %v279
    %v543 = vunpack.c.h.b16 %v279
    %v544 = vunpack.c.l.b16 %v280
    %v545 = vunpack.c.h.b16 %v280
    %v546 = vunpack.c.l.b16 %v281
    %v547 = vunpack.c.h.b16 %v281
    %v548 = vunpack.c.l.b16 %v282
    %v549 = vunpack.c.h.b16 %v282
    %v550 = vunpack.c.l.b16 %v283
    %v551 = vunpack.c.h.b16 %v283
    %v552 = vunpack.c.l.b16 %v284
    %v553 = vunpack.c.h.b16 %v284
    %v554 = vunpack.c.l.b16 %v285
    %v555 = vunpack.c.h.b16 %v285
    %v556 = vunpack.c.l.b16 %v286
    %v557 = vunpack.c.h.b16 %v286
    %v558 = vunpack.c.l.b16 %v287
    %v559 = vunpack.c.h.b16 %v287
    %v560 = vunpack.c.l.b16 %v288
    %v561 = vunpack.c.h.b16 %v288
    %v562 = vunpack.c.l.b16 %v289
    %v563 = vunpack.c.h.b16 %v289
    %v564 = vunpack.c.l.b16 %v290
    %v565 = vunpack.c.h.b16 %v290
    %v566 = vunpack.c.l.b16 %v291
    %v567 = vunpack.c.h.b16 %v291
    %v568 = vunpack.c.l.b16 %v292
    %v569 = vunpack.c.h.b16 %v292
    %v570 = vunpack.c.l.b16 %v293
    %v571 = vunpack.c.h.b16 %v293
    %v572 = vunpack.c.l.b16 %v294
    %v573 = vunpack.c.h.b16 %v294
    %v574 = vunpack.c.l.b16 %v295
    %v575 = vunpack.c.h.b16 %v295
    %v576 = vunpack.c.l.b16 %v296
    %v577 = vunpack.c.h.b16 %v296
    %v578 = vunpack.c.l.b16 %v297
    %v579 = vunpack.c.h.b16 %v297
    %v580 = vunpack.c.l.b16 %v298
    %v581 = vunpack.c.h.b16 %v298
    %v582 = vunpack.c.l.b16 %v299
    %v583 = vunpack.c.h.b16 %v299
    %v584 = vunpack.c.l.b16 %v300
    %v585 = vunpack.c.h.b16 %v300
    %v586 = vunpack.c.l.b16 %v301
    %v587 = vunpack.c.h.b16 %v301
    %v588 = vunpack.c.l.b16 %v302
    %v589 = vunpack.c.h.b16 %v302
    %v590 = vunpack.c.l.b16 %v303
    %v591 = vunpack.c.h.b16 %v303
    %v592 = vpack.c.b16 %v402, %v400
    %v593 = vpack.c.b16 %v403, %v401
    %v594 = vpack.c.b16 %v406, %v404
    %v595 = vpack.c.b16 %v407, %v405
    %v596 = vpack.c.b16 %v410, %v408
    %v597 = vpack.c.b16 %v411, %v409
    %v598 = vpack.c.b16 %v414, %v412
    %v599 = vpack.c.b16 %v415, %v413
    %v600 = vpack.c.b16 %v418, %v416
    %v601 = vpack.c.b16 %v419, %v417
    %v602 = vpack.c.b16 %v422, %v420
    %v603 = vpack.c.b16 %v423, %v421
    %v604 = vpack.c.b16 %v426, %v424
    %v605 = vpack.c.b16 %v427, %v425
    %v606 = vpack.c.b16 %v430, %v428
    %v607 = vpack.c.b16 %v431, %v429
    %v608 = vpack.c.b16 %v434, %v432
    %v609 = vpack.c.b16 %v435, %v433
    %v610 = vpack.c.b16 %v438, %v436
    %v611 = vpack.c.b16 %v439, %v437
    %v612 = vpack.c.b16 %v442, %v440
    %v613 = vpack.c.b16 %v443, %v441
    %v614 = vpack.c.b16 %v446, %v444
    %v615 = vpack.c.b16 %v447, %v445
    %v616 = vpack.c.b16 %v450, %v448
    %v617 = vpack.c.b16 %v451, %v449
    %v618 = vpack.c.b16 %v454, %v452
    %v619 = vpack.c.b16 %v455, %v453
    %v620 = vpack.c.b16 %v458, %v456
    %v621 = vpack.c.b16 %v459, %v457
    %v622 = vpack.c.b16 %v462, %v460
    %v623 = vpack.c.b16 %v463, %v461
    %v624 = vpack.c.b16 %v466, %v464
    %v625 = vpack.c.b16 %v467, %v465
    %v626 = vpack.c.b16 %v470, %v468
    %v627 = vpack.c.b16 %v471, %v469
    %v628 = vpack.c.b16 %v474, %v472
    %v629 = vpack.c.b16 %v475, %v473
    %v630 = vpack.c.b16 %v478, %v476
    %v631 = vpack.c.b16 %v479, %v477
    %v632 = vpack.c.b16 %v482, %v480
    %v633 = vpack.c.b16 %v483, %v481
    %v634 = vpack.c.b16 %v486, %v484
    %v635 = vpack.c.b16 %v487, %v485
    %v636 = vpack.c.b16 %v490, %v488
    %v637 = vpack.c.b16 %v491, %v489
    %v638 = vpack.c.b16 %v494, %v492
    %v639 = vpack.c.b16 %v495, %v493
    %v640 = vpack.c.b16 %v498, %v496
    %v641 = vpack.c.b16 %v499, %v497
    %v642 = vpack.c.b16 %v502, %v500
    %v643 = vpack.c.b16 %v503, %v501
    %v644 = vpack.c.b16 %v506, %v504
    %v645 = vpack.c.b16 %v507, %v505
    %v646 = vpack.c.b16 %v510, %v508
    %v647 = vpack.c.b16 %v511, %v509
    %v648 = vpack.c.b16 %v514, %v512
    %v649 = vpack.c.b16 %v515, %v513
    %v650 = vpack.c.b16 %v518, %v516
    %v651 = vpack.c.b16 %v519, %v517
    %v652 = vpack.c.b16 %v522, %v520
    %v653 = vpack.c.b16 %v523, %v521
    %v654 = vpack.c.b16 %v526, %v524
    %v655 = vpack.c.b16 %v527, %v525
    %v656 = vpack.c.b16 %v530, %v528
    %v657 = vpack.c.b16 %v531, %v529
    %v658 = vpack.c.b16 %v534, %v532
    %v659 = vpack.c.b16 %v535, %v533
    %v660 = vpack.c.b16 %v538, %v536
    %v661 = vpack.c.b16 %v539, %v537
    %v662 = vpack.c.b16 %v542, %v540
    %v663 = vpack.c.b16 %v543, %v541
    %v664 = vpack.c.b16 %v546, %v544
    %v665 = vpack.c.b16 %v547, %v545
    %v666 = vpack.c.b16 %v550, %v548
    %v667 = vpack.c.b16 %v551, %v549
    %v668 = vpack.c.b16 %v554, %v552
    %v669 = vpack.c.b16 %v555, %v553
    %v670 = vpack.c.b16 %v558, %v556
    %v671 = vpack.c.b16 %v559, %v557
    %v672 = vpack.c.b16 %v562, %v560
    %v673 = vpack.c.b16 %v563, %v561
    %v674 = vpack.c.b16 %v566, %v564
    %v675 = vpack.c.b16 %v567, %v565
    %v676 = vpack.c.b16 %v570, %v568
    %v677 = vpack.c.b16 %v571, %v569
    %v678 = vpack.c.b16 %v574, %v572
    %v679 = vpack.c.b16 %v575, %v573
    %v680 = vpack.c.b16 %v578, %v576
    %v681 = vpack.c.b16 %v579, %v577
    %v682 = vpack.c.b16 %v582, %v580
    %v683 = vpack.c.b16 %v583, %v581
    %v684 = vpack.c.b16 %v586, %v584
    %v685 = vpack.c.b16 %v587, %v585
    %v686 = vpack.c.b16 %v590, %v588
    %v687 = vpack.c.b16 %v591, %v589
    %784 = vmatpush.bf16.msra.mxu0 %v606
    %785 = vmatpush.bf16.msra.mxu0 %v604
    %786 = vmatpush.bf16.msra.mxu0 %v602
    %787 = vmatpush.bf16.msra.mxu0 %v600
    %788 = vmatpush.bf16.msra.mxu0 %v598
    %789 = vmatpush.bf16.msra.mxu0 %v596
    %790 = vmatpush.bf16.msra.mxu0 %v594
    %791 = vmatpush.bf16.msra.mxu0 %v592
    %792 = vmatmul.bf16.gmra.mxu0 %v196
    %v793 = vpop.f32.mrf.mxu0
    %v794 = vadd.f32 0.0, %v793
    %v795 = vpop.f32.mrf.mxu0
    %v796 = vadd.f32 0.0, %v795
    %797 = vmatmul.bf16.gmra.mxu0 %v202
    %v798 = vpop.f32.mrf.mxu0
    %v799 = vadd.f32 0.0, %v798
    %v800 = vpop.f32.mrf.mxu0
    %v801 = vadd.f32 0.0, %v800
    %802 = vdwg.mxu0
    %803 = vmatpush.bf16.msra.mxu0 %v622
    %804 = vmatpush.bf16.msra.mxu0 %v620
    %805 = vmatpush.bf16.msra.mxu0 %v618
    %806 = vmatpush.bf16.msra.mxu0 %v616
    %807 = vmatpush.bf16.msra.mxu0 %v614
    %808 = vmatpush.bf16.msra.mxu0 %v612
    %809 = vmatpush.bf16.msra.mxu0 %v610
    %810 = vmatpush.bf16.msra.mxu0 %v608
    %811 = vmatmul.bf16.gmra.mxu0 %v197
    %v812 = vpop.f32.mrf.mxu0
    %v813 = vadd.f32 %v794, %v812
    %v814 = vpop.f32.mrf.mxu0
    %v815 = vadd.f32 %v796, %v814
    %816 = vmatmul.bf16.gmra.mxu0 %v203
    %v817 = vpop.f32.mrf.mxu0
    %v818 = vadd.f32 %v799, %v817
    %v819 = vpop.f32.mrf.mxu0
    %v820 = vadd.f32 %v801, %v819
    %821 = vdwg.mxu0
    %822 = vmatpush.bf16.msra.mxu0 %v638
    %823 = vmatpush.bf16.msra.mxu0 %v636
    %824 = vmatpush.bf16.msra.mxu0 %v634
    %825 = vmatpush.bf16.msra.mxu0 %v632
    %826 = vmatpush.bf16.msra.mxu0 %v630
    %827 = vmatpush.bf16.msra.mxu0 %v628
    %828 = vmatpush.bf16.msra.mxu0 %v626
    %829 = vmatpush.bf16.msra.mxu0 %v624
    %830 = vmatmul.bf16.gmra.mxu0 %v198
    %v831 = vpop.f32.mrf.mxu0
    %v832 = vadd.f32 %v813, %v831
    %v833 = vpop.f32.mrf.mxu0
    %v834 = vadd.f32 %v815, %v833
    %835 = vmatmul.bf16.gmra.mxu0 %v204
    %v836 = vpop.f32.mrf.mxu0
    %v837 = vadd.f32 %v818, %v836
    %v838 = vpop.f32.mrf.mxu0
    %v839 = vadd.f32 %v820, %v838
    %840 = vdwg.mxu0
    %841 = vmatpush.bf16.msra.mxu0 %v654
    %842 = vmatpush.bf16.msra.mxu0 %v652
    %843 = vmatpush.bf16.msra.mxu0 %v650
    %844 = vmatpush.bf16.msra.mxu0 %v648
    %845 = vmatpush.bf16.msra.mxu0 %v646
    %846 = vmatpush.bf16.msra.mxu0 %v644
    %847 = vmatpush.bf16.msra.mxu0 %v642
    %848 = vmatpush.bf16.msra.mxu0 %v640
    %849 = vmatmul.bf16.gmra.mxu0 %v199
    %v850 = vpop.f32.mrf.mxu0
    %v851 = vadd.f32 %v832, %v850
    %v852 = vpop.f32.mrf.mxu0
    %v853 = vadd.f32 %v834, %v852
    %854 = vmatmul.bf16.gmra.mxu0 %v205
    %v855 = vpop.f32.mrf.mxu0
    %v856 = vadd.f32 %v837, %v855
    %v857 = vpop.f32.mrf.mxu0
    %v858 = vadd.f32 %v839, %v857
    %859 = vdwg.mxu0
    %860 = vmatpush.bf16.msra.mxu0 %v670
    %861 = vmatpush.bf16.msra.mxu0 %v668
    %862 = vmatpush.bf16.msra.mxu0 %v666
    %863 = vmatpush.bf16.msra.mxu0 %v664
    %864 = vmatpush.bf16.msra.mxu0 %v662
    %865 = vmatpush.bf16.msra.mxu0 %v660
    %866 = vmatpush.bf16.msra.mxu0 %v658
    %867 = vmatpush.bf16.msra.mxu0 %v656
    %868 = vmatmul.bf16.gmra.mxu0 %v200
    %v869 = vpop.f32.mrf.mxu0
    %v870 = vadd.f32 %v851, %v869
    %v871 = vpop.f32.mrf.mxu0
    %v872 = vadd.f32 %v853, %v871
    %873 = vmatmul.bf16.gmra.mxu0 %v206
    %v874 = vpop.f32.mrf.mxu0
    %v875 = vadd.f32 %v856, %v874
    %v876 = vpop.f32.mrf.mxu0
    %v877 = vadd.f32 %v858, %v876
    %878 = vdwg.mxu0
    %879 = vmatpush.bf16.msra.mxu0 %v686
    %880 = vmatpush.bf16.msra.mxu0 %v684
    %881 = vmatpush.bf16.msra.mxu0 %v682
    %882 = vmatpush.bf16.msra.mxu0 %v680
    %883 = vmatpush.bf16.msra.mxu0 %v678
    %884 = vmatpush.bf16.msra.mxu0 %v676
    %885 = vmatpush.bf16.msra.mxu0 %v674
    %886 = vmatpush.bf16.msra.mxu0 %v672
    %887 = vmatmul.bf16.gmra.mxu0 %v201
    %v888 = vpop.f32.mrf.mxu0
    %v889 = vadd.f32 %v870, %v888
    %v890 = vpop.f32.mrf.mxu0
    %v891 = vadd.f32 %v872, %v890
    %892 = vmatmul.bf16.gmra.mxu0 %v207
    %v893 = vpop.f32.mrf.mxu0
    %v894 = vadd.f32 %v875, %v893
    %v895 = vpop.f32.mrf.mxu0
    %v896 = vadd.f32 %v877, %v895
    %897 = vdwg.mxu0
    %898 = vmatpush.bf16.msra.mxu0 %v607
    %899 = vmatpush.bf16.msra.mxu0 %v605
    %900 = vmatpush.bf16.msra.mxu0 %v603
    %901 = vmatpush.bf16.msra.mxu0 %v601
    %902 = vmatpush.bf16.msra.mxu0 %v599
    %903 = vmatpush.bf16.msra.mxu0 %v597
    %904 = vmatpush.bf16.msra.mxu0 %v595
    %905 = vmatpush.bf16.msra.mxu0 %v593
    %906 = vmatmul.bf16.gmra.mxu0 %v196
    %v907 = vpop.f32.mrf.mxu0
    %v908 = vadd.f32 0.0, %v907
    %v909 = vpop.f32.mrf.mxu0
    %v910 = vadd.f32 0.0, %v909
    %911 = vmatmul.bf16.gmra.mxu0 %v202
    %v912 = vpop.f32.mrf.mxu0
    %v913 = vadd.f32 0.0, %v912
    %v914 = vpop.f32.mrf.mxu0
    %v915 = vadd.f32 0.0, %v914
    %916 = vdwg.mxu0
    %917 = vmatpush.bf16.msra.mxu0 %v623
    %918 = vmatpush.bf16.msra.mxu0 %v621
    %919 = vmatpush.bf16.msra.mxu0 %v619
    %920 = vmatpush.bf16.msra.mxu0 %v617
    %921 = vmatpush.bf16.msra.mxu0 %v615
    %922 = vmatpush.bf16.msra.mxu0 %v613
    %923 = vmatpush.bf16.msra.mxu0 %v611
    %924 = vmatpush.bf16.msra.mxu0 %v609
    %925 = vmatmul.bf16.gmra.mxu0 %v197
    %v926 = vpop.f32.mrf.mxu0
    %v927 = vadd.f32 %v908, %v926
    %v928 = vpop.f32.mrf.mxu0
    %v929 = vadd.f32 %v910, %v928
    %930 = vmatmul.bf16.gmra.mxu0 %v203
    %v931 = vpop.f32.mrf.mxu0
    %v932 = vadd.f32 %v913, %v931
    %v933 = vpop.f32.mrf.mxu0
    %v934 = vadd.f32 %v915, %v933
    %935 = vdwg.mxu0
    %936 = vmatpush.bf16.msra.mxu0 %v639
    %937 = vmatpush.bf16.msra.mxu0 %v637
    %938 = vmatpush.bf16.msra.mxu0 %v635
    %939 = vmatpush.bf16.msra.mxu0 %v633
    %940 = vmatpush.bf16.msra.mxu0 %v631
    %941 = vmatpush.bf16.msra.mxu0 %v629
    %942 = vmatpush.bf16.msra.mxu0 %v627
    %943 = vmatpush.bf16.msra.mxu0 %v625
    %944 = vmatmul.bf16.gmra.mxu0 %v198
    %v945 = vpop.f32.mrf.mxu0
    %v946 = vadd.f32 %v927, %v945
    %v947 = vpop.f32.mrf.mxu0
    %v948 = vadd.f32 %v929, %v947
    %949 = vmatmul.bf16.gmra.mxu0 %v204
    %v950 = vpop.f32.mrf.mxu0
    %v951 = vadd.f32 %v932, %v950
    %v952 = vpop.f32.mrf.mxu0
    %v953 = vadd.f32 %v934, %v952
    %954 = vdwg.mxu0
    %955 = vmatpush.bf16.msra.mxu0 %v655
    %956 = vmatpush.bf16.msra.mxu0 %v653
    %957 = vmatpush.bf16.msra.mxu0 %v651
    %958 = vmatpush.bf16.msra.mxu0 %v649
    %959 = vmatpush.bf16.msra.mxu0 %v647
    %960 = vmatpush.bf16.msra.mxu0 %v645
    %961 = vmatpush.bf16.msra.mxu0 %v643
    %962 = vmatpush.bf16.msra.mxu0 %v641
    %963 = vmatmul.bf16.gmra.mxu0 %v199
    %v964 = vpop.f32.mrf.mxu0
    %v965 = vadd.f32 %v946, %v964
    %v966 = vpop.f32.mrf.mxu0
    %v967 = vadd.f32 %v948, %v966
    %968 = vmatmul.bf16.gmra.mxu0 %v205
    %v969 = vpop.f32.mrf.mxu0
    %v970 = vadd.f32 %v951, %v969
    %v971 = vpop.f32.mrf.mxu0
    %v972 = vadd.f32 %v953, %v971
    %973 = vdwg.mxu0
    %974 = vmatpush.bf16.msra.mxu0 %v671
    %975 = vmatpush.bf16.msra.mxu0 %v669
    %976 = vmatpush.bf16.msra.mxu0 %v667
    %977 = vmatpush.bf16.msra.mxu0 %v665
    %978 = vmatpush.bf16.msra.mxu0 %v663
    %979 = vmatpush.bf16.msra.mxu0 %v661
    %980 = vmatpush.bf16.msra.mxu0 %v659
    %981 = vmatpush.bf16.msra.mxu0 %v657
    %982 = vmatmul.bf16.gmra.mxu0 %v200
    %v983 = vpop.f32.mrf.mxu0
    %v984 = vadd.f32 %v965, %v983
    %v985 = vpop.f32.mrf.mxu0
    %v986 = vadd.f32 %v967, %v985
    %987 = vmatmul.bf16.gmra.mxu0 %v206
    %v988 = vpop.f32.mrf.mxu0
    %v989 = vadd.f32 %v970, %v988
    %v990 = vpop.f32.mrf.mxu0
    %v991 = vadd.f32 %v972, %v990
    %992 = vdwg.mxu0
    %993 = vmatpush.bf16.msra.mxu0 %v687
    %994 = vmatpush.bf16.msra.mxu0 %v685
    %995 = vmatpush.bf16.msra.mxu0 %v683
    %996 = vmatpush.bf16.msra.mxu0 %v681
    %997 = vmatpush.bf16.msra.mxu0 %v679
    %998 = vmatpush.bf16.msra.mxu0 %v677
    %999 = vmatpush.bf16.msra.mxu0 %v675
    %1000 = vmatpush.bf16.msra.mxu0 %v673
    %1001 = vmatmul.bf16.gmra.mxu0 %v201
    %v1002 = vpop.f32.mrf.mxu0
    %v1003 = vadd.f32 %v984, %v1002
    %v1004 = vpop.f32.mrf.mxu0
    %v1005 = vadd.f32 %v986, %v1004
    %1006 = vmatmul.bf16.gmra.mxu0 %v207
    %v1007 = vpop.f32.mrf.mxu0
    %v1008 = vadd.f32 %v989, %v1007
    %v1009 = vpop.f32.mrf.mxu0
    %v1010 = vadd.f32 %v991, %v1009
    %1011 = vdwg.mxu0
    %v1012 = vld [vmem:[%s2] sm:$0x1]
    %v1013 = vld [vmem:[%s3] sm:$0x1]
    %v1014 = vadd.f32 %v889, %v891
    %v1015 = vadd.f32 %v1014, %v894
    %v1016 = vadd.f32 %v1015, %v896
    %v1017 = vrot.slane %v1016, 4
    %v1018 = vadd.f32 %v1016, %v1017
    %v1019 = vrot.slane %v1018, 2
    %v1020 = vadd.f32 %v1018, %v1019
    %v1021 = vrot.slane %v1020, 1
    %v1022 = vadd.f32 %v1020, %v1021
    %v1023 = vadd.f32 %v1003, %v1005
    %v1024 = vadd.f32 %v1023, %v1008
    %v1025 = vadd.f32 %v1024, %v1010
    %v1026 = vrot.slane %v1025, 4
    %v1027 = vadd.f32 %v1025, %v1026
    %v1028 = vrot.slane %v1027, 2
    %v1029 = vadd.f32 %v1027, %v1028
    %v1030 = vrot.slane %v1029, 1
    %v1031 = vadd.f32 %v1029, %v1030
    %v1032 = vmul.f32 %v889, %v889
    %v1033 = vmul.f32 %v1003, %v1003
    %v1034 = vmul.f32 %v891, %v891
    %v1035 = vmul.f32 %v1005, %v1005
    %v1036 = vmul.f32 %v894, %v894
    %v1037 = vmul.f32 %v1008, %v1008
    %v1038 = vmul.f32 %v896, %v896
    %v1039 = vmul.f32 %v1010, %v1010
    %v1040 = vadd.f32 %v1032, %v1034
    %v1041 = vadd.f32 %v1040, %v1036
    %v1042 = vadd.f32 %v1041, %v1038
    %v1043 = vrot.slane %v1042, 4
    %v1044 = vadd.f32 %v1042, %v1043
    %v1045 = vrot.slane %v1044, 2
    %v1046 = vadd.f32 %v1044, %v1045
    %v1047 = vrot.slane %v1046, 1
    %v1048 = vadd.f32 %v1046, %v1047
    %v1049 = vadd.f32 %v1033, %v1035
    %v1050 = vadd.f32 %v1049, %v1037
    %v1051 = vadd.f32 %v1050, %v1039
    %v1052 = vrot.slane %v1051, 4
    %v1053 = vadd.f32 %v1051, %v1052
    %v1054 = vrot.slane %v1053, 2
    %v1055 = vadd.f32 %v1053, %v1054
    %v1056 = vrot.slane %v1055, 1
    %v1057 = vadd.f32 %v1055, %v1056
    %1058 = vmatpush.msra.mxu0 %v68
    %1059 = vmatpush.msra.mxu0 %v67
    %1060 = vmatpush.msra.mxu0 %v66
    %1061 = vmatpush.msra.mxu0 %v65
    %1062 = vmatpush.msra.mxu0 %v64
    %1063 = vmatpush.msra.mxu0 %v63
    %1064 = vmatpush.msra.mxu0 %v62
    %1065 = vmatpush.msra.mxu0 %v61
    %1066 = vmatpush.msra.mxu0 %v60
    %1067 = vmatpush.msra.mxu0 %v59
    %1068 = vmatpush.msra.mxu0 %v58
    %1069 = vmatpush.msra.mxu0 %v57
    %1070 = vmatpush.msra.mxu0 %v56
    %1071 = vmatpush.msra.mxu0 %v55
    %1072 = vmatpush.msra.mxu0 %v54
    %1073 = vmatpush.msra.mxu0 %v53
    %1074 = vmatmul.f32.gmra.mxu0 %v1022
    %v1075 = vpop.f32.mrf.mxu0
    %v1076 = vadd.f32 0.0, %v1075
    %1077 = vdwg.mxu0
    %1078 = vmatpush.msra.mxu0 %v84
    %1079 = vmatpush.msra.mxu0 %v83
    %1080 = vmatpush.msra.mxu0 %v82
    %1081 = vmatpush.msra.mxu0 %v81
    %1082 = vmatpush.msra.mxu0 %v80
    %1083 = vmatpush.msra.mxu0 %v79
    %1084 = vmatpush.msra.mxu0 %v78
    %1085 = vmatpush.msra.mxu0 %v77
    %1086 = vmatpush.msra.mxu0 %v76
    %1087 = vmatpush.msra.mxu0 %v75
    %1088 = vmatpush.msra.mxu0 %v74
    %1089 = vmatpush.msra.mxu0 %v73
    %1090 = vmatpush.msra.mxu0 %v72
    %1091 = vmatpush.msra.mxu0 %v71
    %1092 = vmatpush.msra.mxu0 %v70
    %1093 = vmatpush.msra.mxu0 %v69
    %1094 = vmatmul.f32.gmra.mxu0 %v1031
    %v1095 = vpop.f32.mrf.mxu0
    %v1096 = vadd.f32 %v1076, %v1095
    %1097 = vdwg.mxu0
    %1098 = vmatpush.msra.mxu0 %v68
    %1099 = vmatpush.msra.mxu0 %v67
    %1100 = vmatpush.msra.mxu0 %v66
    %1101 = vmatpush.msra.mxu0 %v65
    %1102 = vmatpush.msra.mxu0 %v64
    %1103 = vmatpush.msra.mxu0 %v63
    %1104 = vmatpush.msra.mxu0 %v62
    %1105 = vmatpush.msra.mxu0 %v61
    %1106 = vmatpush.msra.mxu0 %v60
    %1107 = vmatpush.msra.mxu0 %v59
    %1108 = vmatpush.msra.mxu0 %v58
    %1109 = vmatpush.msra.mxu0 %v57
    %1110 = vmatpush.msra.mxu0 %v56
    %1111 = vmatpush.msra.mxu0 %v55
    %1112 = vmatpush.msra.mxu0 %v54
    %1113 = vmatpush.msra.mxu0 %v53
    %1114 = vmatmul.f32.gmra.mxu0 %v1048
    %v1115 = vpop.f32.mrf.mxu0
    %v1116 = vadd.f32 0.0, %v1115
    %1117 = vdwg.mxu0
    %1118 = vmatpush.msra.mxu0 %v84
    %1119 = vmatpush.msra.mxu0 %v83
    %1120 = vmatpush.msra.mxu0 %v82
    %1121 = vmatpush.msra.mxu0 %v81
    %1122 = vmatpush.msra.mxu0 %v80
    %1123 = vmatpush.msra.mxu0 %v79
    %1124 = vmatpush.msra.mxu0 %v78
    %1125 = vmatpush.msra.mxu0 %v77
    %1126 = vmatpush.msra.mxu0 %v76
    %1127 = vmatpush.msra.mxu0 %v75
    %1128 = vmatpush.msra.mxu0 %v74
    %1129 = vmatpush.msra.mxu0 %v73
    %1130 = vmatpush.msra.mxu0 %v72
    %1131 = vmatpush.msra.mxu0 %v71
    %1132 = vmatpush.msra.mxu0 %v70
    %1133 = vmatpush.msra.mxu0 %v69
    %1134 = vmatmul.f32.gmra.mxu0 %v1057
    %v1135 = vpop.f32.mrf.mxu0
    %v1136 = vadd.f32 %v1116, %v1135
    %1137 = vdwg.mxu0
    %v1138 = vmul.f32 %v1096, 0.001953125
    %v1139 = vmul.f32 %v1136, 0.001953125
    %v1140 = vmul.f32 %v1138, %v1138
    %v1141 = vsub.f32 %v1139, %v1140
    %v1142 = vadd.f32 %v1141, 1e-05
    %v1143 = vrsqrt.pop %v1142
    %v1144 = vmul.f32 %v1143, %v1142
    %v1145 = vmul.f32 %v1144, %v1143
    %v1146 = vmul.f32 0.5, %v1145
    %v1147 = vsub.f32 1.5, %v1146
    %v1148 = vmul.f32 %v1143, %v1147
    %vm1149 = vweird.f32 %v1142
    %vm1150 = vweird.f32 %v1143
    %vm1151 = vmor %vm1149, %vm1150
    %v1152 = vsel %vm1151, %v1143, %v1148
    %v1153 = vmul.f32 %v1012, %v1152
    %v1154 = vmul.f32 %v1138, %v1153
    %v1155 = vsub.f32 %v1013, %v1154
    %v1157 = vperm.slane %v1153, 0
    %1158 = vrot.lane.b32.xlu0 %v1157, 16
    %v1159 = vpop.permute.xlu0 %1158
    %1161 = vrot.lane.b32.xlu0 %v1157, 32
    %v1162 = vpop.permute.xlu0 %1161
    %1164 = vrot.lane.b32.xlu0 %v1157, 48
    %v1165 = vpop.permute.xlu0 %1164
    %1167 = vrot.lane.b32.xlu0 %v1157, 64
    %v1168 = vpop.permute.xlu0 %1167
    %1170 = vrot.lane.b32.xlu0 %v1157, 80
    %v1171 = vpop.permute.xlu0 %1170
    %1173 = vrot.lane.b32.xlu0 %v1157, 96
    %v1174 = vpop.permute.xlu0 %1173
    %1176 = vrot.lane.b32.xlu0 %v1157, 112
    %v1177 = vpop.permute.xlu0 %1176
    %vm1179 = vcmask 130048
    %v1180 = vsel %vm1179, %v1153, %v1159
    %vm1181 = vcmask 261120
    %v1182 = vsel %vm1181, %v1180, %v1162
    %vm1183 = vcmask 392192
    %v1184 = vsel %vm1183, %v1182, %v1165
    %vm1185 = vcmask 523264
    %v1186 = vsel %vm1185, %v1184, %v1168
    %vm1187 = vcmask 654336
    %v1188 = vsel %vm1187, %v1186, %v1171
    %vm1189 = vcmask 785408
    %v1190 = vsel %vm1189, %v1188, %v1174
    %vm1191 = vcmask 916480
    %v1192 = vsel %vm1191, %v1190, %v1177
    %v1194 = vperm.slane %v1155, 0
    %1195 = vrot.lane.b32.xlu0 %v1194, 16
    %v1196 = vpop.permute.xlu0 %1195
    %1198 = vrot.lane.b32.xlu0 %v1194, 32
    %v1199 = vpop.permute.xlu0 %1198
    %1201 = vrot.lane.b32.xlu0 %v1194, 48
    %v1202 = vpop.permute.xlu0 %1201
    %1204 = vrot.lane.b32.xlu0 %v1194, 64
    %v1205 = vpop.permute.xlu0 %1204
    %1207 = vrot.lane.b32.xlu0 %v1194, 80
    %v1208 = vpop.permute.xlu0 %1207
    %1210 = vrot.lane.b32.xlu0 %v1194, 96
    %v1211 = vpop.permute.xlu0 %1210
    %1213 = vrot.lane.b32.xlu0 %v1194, 112
    %v1214 = vpop.permute.xlu0 %1213
    %v1216 = vsel %vm1179, %v1155, %v1196
    %v1217 = vsel %vm1181, %v1216, %v1199
    %v1218 = vsel %vm1183, %v1217, %v1202
    %v1219 = vsel %vm1185, %v1218, %v1205
    %v1220 = vsel %vm1187, %v1219, %v1208
    %v1221 = vsel %vm1189, %v1220, %v1211
    %v1222 = vsel %vm1191, %v1221, %v1214
    %v1223 = vperm.slane %v1192, 0
    %v1224 = vmul.f32 %v889, %v1223
    %v1225 = vmul.f32 %v1003, %v1223
    %v1226 = vmul.f32 %v891, %v1223
    %v1227 = vmul.f32 %v1005, %v1223
    %v1228 = vmul.f32 %v894, %v1223
    %v1229 = vmul.f32 %v1008, %v1223
    %v1230 = vmul.f32 %v896, %v1223
    %v1231 = vmul.f32 %v1010, %v1223
    %v1232 = vperm.slane %v1222, 0
    %v1233 = vadd.f32 %v1224, %v1232
    %v1234 = vadd.f32 %v1225, %v1232
    %v1235 = vadd.f32 %v1226, %v1232
    %v1236 = vadd.f32 %v1227, %v1232
    %v1237 = vadd.f32 %v1228, %v1232
    %v1238 = vadd.f32 %v1229, %v1232
    %v1239 = vadd.f32 %v1230, %v1232
    %v1240 = vadd.f32 %v1231, %v1232
    %v1241 = vmax.f32 %v1233, 0.0
    %v1242 = vmax.f32 %v1234, 0.0
    %v1243 = vmax.f32 %v1235, 0.0
    %v1244 = vmax.f32 %v1236, 0.0
    %v1245 = vmax.f32 %v1237, 0.0
    %v1246 = vmax.f32 %v1238, 0.0
    %v1247 = vmax.f32 %v1239, 0.0
    %v1248 = vmax.f32 %v1240, 0.0
    %v1249 = vrot.slane %v1241, 7
    %v1250 = vrot.slane %v1242, 7
    %v1251 = vrot.slane %v1243, 7
    %v1252 = vrot.slane %v1244, 7
    %v1253 = vrot.slane %v1245, 7
    %v1254 = vrot.slane %v1246, 7
    %v1255 = vrot.slane %v1247, 7
    %v1256 = vrot.slane %v1248, 7
    %v1257 = vsel %vm154, %v1253, %v1255
    %v1258 = vsel %vm154, %v1254, %v1256
    %v1259 = vsel %vm154, %v1251, %v1253
    %v1260 = vsel %vm154, %v1252, %v1254
    %v1261 = vsel %vm154, %v1249, %v1251
    %v1262 = vsel %vm154, %v1250, %v1252
    %v1263 = vsel %vm154, %v1255, %v1249
    %v1264 = vsel %vm154, %v1256, %v1250
    %v1265 = vsel %vm138, %v1263, 0.0
    %v1266 = vsel %vm138, %v1264, 0.0
    %v1267 = vsel %vm139, %v1261, 0.0
    %v1268 = vsel %vm139, %v1262, 0.0
    %v1269 = vsel %vm140, %v1259, 0.0
    %v1270 = vsel %vm140, %v1260, 0.0
    %v1271 = vsel %vm141, %v1257, 0.0
    %v1272 = vsel %vm141, %v1258, 0.0
    %v1273 = vrot.slane %v1241, 1
    %v1274 = vrot.slane %v1242, 1
    %v1275 = vrot.slane %v1243, 1
    %v1276 = vrot.slane %v1244, 1
    %v1277 = vrot.slane %v1245, 1
    %v1278 = vrot.slane %v1246, 1
    %v1279 = vrot.slane %v1247, 1
    %v1280 = vrot.slane %v1248, 1
    %v1281 = vsel %vm179, %v1277, %v1279
    %v1282 = vsel %vm179, %v1278, %v1280
    %v1283 = vsel %vm179, %v1275, %v1277
    %v1284 = vsel %vm179, %v1276, %v1278
    %v1285 = vsel %vm179, %v1273, %v1275
    %v1286 = vsel %vm179, %v1274, %v1276
    %v1287 = vsel %vm179, %v1279, %v1273
    %v1288 = vsel %vm179, %v1280, %v1274
    %v1289 = vsel %vm142, %v1285, 0.0
    %v1290 = vsel %vm142, %v1286, 0.0
    %v1291 = vsel %vm143, %v1283, 0.0
    %v1292 = vsel %vm143, %v1284, 0.0
    %v1293 = vsel %vm144, %v1281, 0.0
    %v1294 = vsel %vm144, %v1282, 0.0
    %v1295 = vsel %vm145, %v1287, 0.0
    %v1296 = vsel %vm145, %v1288, 0.0
    %v1297 = vpack.c.bf16 %v1267, %v1265
    %v1298 = vpack.c.bf16 %v1268, %v1266
    %v1299 = vpack.c.bf16 %v1243, %v1241
    %v1300 = vpack.c.bf16 %v1244, %v1242
    %v1301 = vpack.c.bf16 %v1291, %v1289
    %v1302 = vpack.c.bf16 %v1292, %v1290
    %v1303 = vpack.c.bf16 %v1271, %v1269
    %v1304 = vpack.c.bf16 %v1272, %v1270
    %v1305 = vpack.c.bf16 %v1247, %v1245
    %v1306 = vpack.c.bf16 %v1248, %v1246
    %v1307 = vpack.c.bf16 %v1295, %v1293
    %v1308 = vpack.c.bf16 %v1296, %v1294
    %v1309 = vld [vmem:[#allocation2] sm:$0xff]
    %v1310 = vld [vmem:[#allocation2 + $0x8] sm:$0xff]
    %v1311 = vld [vmem:[#allocation2 + $0x10] sm:$0xff]
    %v1312 = vld [vmem:[#allocation2 + $0x18] sm:$0xff]
    %v1313 = vld [vmem:[#allocation2 + $0x20] sm:$0xff]
    %v1314 = vld [vmem:[#allocation2 + $0x28] sm:$0xff]
    %v1315 = vld [vmem:[#allocation2 + $0x30] sm:$0xff]
    %v1316 = vld [vmem:[#allocation2 + $0x38] sm:$0xff]
    %v1317 = vld [vmem:[#allocation2 + $0x40] sm:$0xff]
    %v1318 = vld [vmem:[#allocation2 + $0x48] sm:$0xff]
    %v1319 = vld [vmem:[#allocation2 + $0x50] sm:$0xff]
    %v1320 = vld [vmem:[#allocation2 + $0x58] sm:$0xff]
    %v1321 = vld [vmem:[#allocation2 + $0x60] sm:$0xff]
    %v1322 = vld [vmem:[#allocation2 + $0x68] sm:$0xff]
    %v1323 = vld [vmem:[#allocation2 + $0x70] sm:$0xff]
    %v1324 = vld [vmem:[#allocation2 + $0x78] sm:$0xff]
    %v1325 = vld [vmem:[#allocation2 + $0x80] sm:$0xff]
    %v1326 = vld [vmem:[#allocation2 + $0x88] sm:$0xff]
    %v1327 = vld [vmem:[#allocation2 + $0x90] sm:$0xff]
    %v1328 = vld [vmem:[#allocation2 + $0x98] sm:$0xff]
    %v1329 = vld [vmem:[#allocation2 + $0xa0] sm:$0xff]
    %v1330 = vld [vmem:[#allocation2 + $0xa8] sm:$0xff]
    %v1331 = vld [vmem:[#allocation2 + $0xb0] sm:$0xff]
    %v1332 = vld [vmem:[#allocation2 + $0xb8] sm:$0xff]
    %v1333 = vld [vmem:[#allocation2 + $0xc0] sm:$0xff]
    %v1334 = vld [vmem:[#allocation2 + $0xc8] sm:$0xff]
    %v1335 = vld [vmem:[#allocation2 + $0xd0] sm:$0xff]
    %v1336 = vld [vmem:[#allocation2 + $0xd8] sm:$0xff]
    %v1337 = vld [vmem:[#allocation2 + $0xe0] sm:$0xff]
    %v1338 = vld [vmem:[#allocation2 + $0xe8] sm:$0xff]
    %v1339 = vld [vmem:[#allocation2 + $0xf0] sm:$0xff]
    %v1340 = vld [vmem:[#allocation2 + $0xf8] sm:$0xff]
    %v1341 = vld [vmem:[#allocation2 + $0x100] sm:$0xff]
    %v1342 = vld [vmem:[#allocation2 + $0x108] sm:$0xff]
    %v1343 = vld [vmem:[#allocation2 + $0x110] sm:$0xff]
    %v1344 = vld [vmem:[#allocation2 + $0x118] sm:$0xff]
    %v1345 = vld [vmem:[#allocation2 + $0x120] sm:$0xff]
    %v1346 = vld [vmem:[#allocation2 + $0x128] sm:$0xff]
    %v1347 = vld [vmem:[#allocation2 + $0x130] sm:$0xff]
    %v1348 = vld [vmem:[#allocation2 + $0x138] sm:$0xff]
    %v1349 = vld [vmem:[#allocation2 + $0x140] sm:$0xff]
    %v1350 = vld [vmem:[#allocation2 + $0x148] sm:$0xff]
    %v1351 = vld [vmem:[#allocation2 + $0x150] sm:$0xff]
    %v1352 = vld [vmem:[#allocation2 + $0x158] sm:$0xff]
    %v1353 = vld [vmem:[#allocation2 + $0x160] sm:$0xff]
    %v1354 = vld [vmem:[#allocation2 + $0x168] sm:$0xff]
    %v1355 = vld [vmem:[#allocation2 + $0x170] sm:$0xff]
    %v1356 = vld [vmem:[#allocation2 + $0x178] sm:$0xff]
    %v1357 = vld [vmem:[#allocation2 + $0x180] sm:$0xff]
    %v1358 = vld [vmem:[#allocation2 + $0x188] sm:$0xff]
    %v1359 = vld [vmem:[#allocation2 + $0x190] sm:$0xff]
    %v1360 = vld [vmem:[#allocation2 + $0x198] sm:$0xff]
    %v1361 = vld [vmem:[#allocation2 + $0x1a0] sm:$0xff]
    %v1362 = vld [vmem:[#allocation2 + $0x1a8] sm:$0xff]
    %v1363 = vld [vmem:[#allocation2 + $0x1b0] sm:$0xff]
    %v1364 = vld [vmem:[#allocation2 + $0x1b8] sm:$0xff]
    %v1365 = vld [vmem:[#allocation2 + $0x1c0] sm:$0xff]
    %v1366 = vld [vmem:[#allocation2 + $0x1c8] sm:$0xff]
    %v1367 = vld [vmem:[#allocation2 + $0x1d0] sm:$0xff]
    %v1368 = vld [vmem:[#allocation2 + $0x1d8] sm:$0xff]
    %v1369 = vld [vmem:[#allocation2 + $0x1e0] sm:$0xff]
    %v1370 = vld [vmem:[#allocation2 + $0x1e8] sm:$0xff]
    %v1371 = vld [vmem:[#allocation2 + $0x1f0] sm:$0xff]
    %v1372 = vld [vmem:[#allocation2 + $0x1f8] sm:$0xff]
    %v1373 = vld [vmem:[#allocation2 + $0x200] sm:$0xff]
    %v1374 = vld [vmem:[#allocation2 + $0x208] sm:$0xff]
    %v1375 = vld [vmem:[#allocation2 + $0x210] sm:$0xff]
    %v1376 = vld [vmem:[#allocation2 + $0x218] sm:$0xff]
    %v1377 = vld [vmem:[#allocation2 + $0x220] sm:$0xff]
    %v1378 = vld [vmem:[#allocation2 + $0x228] sm:$0xff]
    %v1379 = vld [vmem:[#allocation2 + $0x230] sm:$0xff]
    %v1380 = vld [vmem:[#allocation2 + $0x238] sm:$0xff]
    %v1381 = vld [vmem:[#allocation2 + $0x240] sm:$0xff]
    %v1382 = vld [vmem:[#allocation2 + $0x248] sm:$0xff]
    %v1383 = vld [vmem:[#allocation2 + $0x250] sm:$0xff]
    %v1384 = vld [vmem:[#allocation2 + $0x258] sm:$0xff]
    %v1385 = vld [vmem:[#allocation2 + $0x260] sm:$0xff]
    %v1386 = vld [vmem:[#allocation2 + $0x268] sm:$0xff]
    %v1387 = vld [vmem:[#allocation2 + $0x270] sm:$0xff]
    %v1388 = vld [vmem:[#allocation2 + $0x278] sm:$0xff]
    %v1389 = vld [vmem:[#allocation2 + $0x280] sm:$0xff]
    %v1390 = vld [vmem:[#allocation2 + $0x288] sm:$0xff]
    %v1391 = vld [vmem:[#allocation2 + $0x290] sm:$0xff]
    %v1392 = vld [vmem:[#allocation2 + $0x298] sm:$0xff]
    %v1393 = vld [vmem:[#allocation2 + $0x2a0] sm:$0xff]
    %v1394 = vld [vmem:[#allocation2 + $0x2a8] sm:$0xff]
    %v1395 = vld [vmem:[#allocation2 + $0x2b0] sm:$0xff]
    %v1396 = vld [vmem:[#allocation2 + $0x2b8] sm:$0xff]
    %v1397 = vld [vmem:[#allocation2 + $0x2c0] sm:$0xff]
    %v1398 = vld [vmem:[#allocation2 + $0x2c8] sm:$0xff]
    %v1399 = vld [vmem:[#allocation2 + $0x2d0] sm:$0xff]
    %v1400 = vld [vmem:[#allocation2 + $0x2d8] sm:$0xff]
    %v1401 = vld [vmem:[#allocation2 + $0x2e0] sm:$0xff]
    %v1402 = vld [vmem:[#allocation2 + $0x2e8] sm:$0xff]
    %v1403 = vld [vmem:[#allocation2 + $0x2f0] sm:$0xff]
    %v1404 = vld [vmem:[#allocation2 + $0x2f8] sm:$0xff]
    %v1501 = vunpack.c.l.b16 %v1309
    %v1502 = vunpack.c.h.b16 %v1309
    %v1503 = vunpack.c.l.b16 %v1310
    %v1504 = vunpack.c.h.b16 %v1310
    %v1505 = vunpack.c.l.b16 %v1311
    %v1506 = vunpack.c.h.b16 %v1311
    %v1507 = vunpack.c.l.b16 %v1312
    %v1508 = vunpack.c.h.b16 %v1312
    %v1509 = vunpack.c.l.b16 %v1313
    %v1510 = vunpack.c.h.b16 %v1313
    %v1511 = vunpack.c.l.b16 %v1314
    %v1512 = vunpack.c.h.b16 %v1314
    %v1513 = vunpack.c.l.b16 %v1315
    %v1514 = vunpack.c.h.b16 %v1315
    %v1515 = vunpack.c.l.b16 %v1316
    %v1516 = vunpack.c.h.b16 %v1316
    %v1517 = vunpack.c.l.b16 %v1317
    %v1518 = vunpack.c.h.b16 %v1317
    %v1519 = vunpack.c.l.b16 %v1318
    %v1520 = vunpack.c.h.b16 %v1318
    %v1521 = vunpack.c.l.b16 %v1319
    %v1522 = vunpack.c.h.b16 %v1319
    %v1523 = vunpack.c.l.b16 %v1320
    %v1524 = vunpack.c.h.b16 %v1320
    %v1525 = vunpack.c.l.b16 %v1321
    %v1526 = vunpack.c.h.b16 %v1321
    %v1527 = vunpack.c.l.b16 %v1322
    %v1528 = vunpack.c.h.b16 %v1322
    %v1529 = vunpack.c.l.b16 %v1323
    %v1530 = vunpack.c.h.b16 %v1323
    %v1531 = vunpack.c.l.b16 %v1324
    %v1532 = vunpack.c.h.b16 %v1324
    %v1533 = vunpack.c.l.b16 %v1325
    %v1534 = vunpack.c.h.b16 %v1325
    %v1535 = vunpack.c.l.b16 %v1326
    %v1536 = vunpack.c.h.b16 %v1326
    %v1537 = vunpack.c.l.b16 %v1327
    %v1538 = vunpack.c.h.b16 %v1327
    %v1539 = vunpack.c.l.b16 %v1328
    %v1540 = vunpack.c.h.b16 %v1328
    %v1541 = vunpack.c.l.b16 %v1329
    %v1542 = vunpack.c.h.b16 %v1329
    %v1543 = vunpack.c.l.b16 %v1330
    %v1544 = vunpack.c.h.b16 %v1330
    %v1545 = vunpack.c.l.b16 %v1331
    %v1546 = vunpack.c.h.b16 %v1331
    %v1547 = vunpack.c.l.b16 %v1332
    %v1548 = vunpack.c.h.b16 %v1332
    %v1549 = vunpack.c.l.b16 %v1333
    %v1550 = vunpack.c.h.b16 %v1333
    %v1551 = vunpack.c.l.b16 %v1334
    %v1552 = vunpack.c.h.b16 %v1334
    %v1553 = vunpack.c.l.b16 %v1335
    %v1554 = vunpack.c.h.b16 %v1335
    %v1555 = vunpack.c.l.b16 %v1336
    %v1556 = vunpack.c.h.b16 %v1336
    %v1557 = vunpack.c.l.b16 %v1337
    %v1558 = vunpack.c.h.b16 %v1337
    %v1559 = vunpack.c.l.b16 %v1338
    %v1560 = vunpack.c.h.b16 %v1338
    %v1561 = vunpack.c.l.b16 %v1339
    %v1562 = vunpack.c.h.b16 %v1339
    %v1563 = vunpack.c.l.b16 %v1340
    %v1564 = vunpack.c.h.b16 %v1340
    %v1565 = vunpack.c.l.b16 %v1341
    %v1566 = vunpack.c.h.b16 %v1341
    %v1567 = vunpack.c.l.b16 %v1342
    %v1568 = vunpack.c.h.b16 %v1342
    %v1569 = vunpack.c.l.b16 %v1343
    %v1570 = vunpack.c.h.b16 %v1343
    %v1571 = vunpack.c.l.b16 %v1344
    %v1572 = vunpack.c.h.b16 %v1344
    %v1573 = vunpack.c.l.b16 %v1345
    %v1574 = vunpack.c.h.b16 %v1345
    %v1575 = vunpack.c.l.b16 %v1346
    %v1576 = vunpack.c.h.b16 %v1346
    %v1577 = vunpack.c.l.b16 %v1347
    %v1578 = vunpack.c.h.b16 %v1347
    %v1579 = vunpack.c.l.b16 %v1348
    %v1580 = vunpack.c.h.b16 %v1348
    %v1581 = vunpack.c.l.b16 %v1349
    %v1582 = vunpack.c.h.b16 %v1349
    %v1583 = vunpack.c.l.b16 %v1350
    %v1584 = vunpack.c.h.b16 %v1350
    %v1585 = vunpack.c.l.b16 %v1351
    %v1586 = vunpack.c.h.b16 %v1351
    %v1587 = vunpack.c.l.b16 %v1352
    %v1588 = vunpack.c.h.b16 %v1352
    %v1589 = vunpack.c.l.b16 %v1353
    %v1590 = vunpack.c.h.b16 %v1353
    %v1591 = vunpack.c.l.b16 %v1354
    %v1592 = vunpack.c.h.b16 %v1354
    %v1593 = vunpack.c.l.b16 %v1355
    %v1594 = vunpack.c.h.b16 %v1355
    %v1595 = vunpack.c.l.b16 %v1356
    %v1596 = vunpack.c.h.b16 %v1356
    %v1597 = vunpack.c.l.b16 %v1357
    %v1598 = vunpack.c.h.b16 %v1357
    %v1599 = vunpack.c.l.b16 %v1358
    %v1600 = vunpack.c.h.b16 %v1358
    %v1601 = vunpack.c.l.b16 %v1359
    %v1602 = vunpack.c.h.b16 %v1359
    %v1603 = vunpack.c.l.b16 %v1360
    %v1604 = vunpack.c.h.b16 %v1360
    %v1605 = vunpack.c.l.b16 %v1361
    %v1606 = vunpack.c.h.b16 %v1361
    %v1607 = vunpack.c.l.b16 %v1362
    %v1608 = vunpack.c.h.b16 %v1362
    %v1609 = vunpack.c.l.b16 %v1363
    %v1610 = vunpack.c.h.b16 %v1363
    %v1611 = vunpack.c.l.b16 %v1364
    %v1612 = vunpack.c.h.b16 %v1364
    %v1613 = vunpack.c.l.b16 %v1365
    %v1614 = vunpack.c.h.b16 %v1365
    %v1615 = vunpack.c.l.b16 %v1366
    %v1616 = vunpack.c.h.b16 %v1366
    %v1617 = vunpack.c.l.b16 %v1367
    %v1618 = vunpack.c.h.b16 %v1367
    %v1619 = vunpack.c.l.b16 %v1368
    %v1620 = vunpack.c.h.b16 %v1368
    %v1621 = vunpack.c.l.b16 %v1369
    %v1622 = vunpack.c.h.b16 %v1369
    %v1623 = vunpack.c.l.b16 %v1370
    %v1624 = vunpack.c.h.b16 %v1370
    %v1625 = vunpack.c.l.b16 %v1371
    %v1626 = vunpack.c.h.b16 %v1371
    %v1627 = vunpack.c.l.b16 %v1372
    %v1628 = vunpack.c.h.b16 %v1372
    %v1629 = vunpack.c.l.b16 %v1373
    %v1630 = vunpack.c.h.b16 %v1373
    %v1631 = vunpack.c.l.b16 %v1374
    %v1632 = vunpack.c.h.b16 %v1374
    %v1633 = vunpack.c.l.b16 %v1375
    %v1634 = vunpack.c.h.b16 %v1375
    %v1635 = vunpack.c.l.b16 %v1376
    %v1636 = vunpack.c.h.b16 %v1376
    %v1637 = vunpack.c.l.b16 %v1377
    %v1638 = vunpack.c.h.b16 %v1377
    %v1639 = vunpack.c.l.b16 %v1378
    %v1640 = vunpack.c.h.b16 %v1378
    %v1641 = vunpack.c.l.b16 %v1379
    %v1642 = vunpack.c.h.b16 %v1379
    %v1643 = vunpack.c.l.b16 %v1380
    %v1644 = vunpack.c.h.b16 %v1380
    %v1645 = vunpack.c.l.b16 %v1381
    %v1646 = vunpack.c.h.b16 %v1381
    %v1647 = vunpack.c.l.b16 %v1382
    %v1648 = vunpack.c.h.b16 %v1382
    %v1649 = vunpack.c.l.b16 %v1383
    %v1650 = vunpack.c.h.b16 %v1383
    %v1651 = vunpack.c.l.b16 %v1384
    %v1652 = vunpack.c.h.b16 %v1384
    %v1653 = vunpack.c.l.b16 %v1385
    %v1654 = vunpack.c.h.b16 %v1385
    %v1655 = vunpack.c.l.b16 %v1386
    %v1656 = vunpack.c.h.b16 %v1386
    %v1657 = vunpack.c.l.b16 %v1387
    %v1658 = vunpack.c.h.b16 %v1387
    %v1659 = vunpack.c.l.b16 %v1388
    %v1660 = vunpack.c.h.b16 %v1388
    %v1661 = vunpack.c.l.b16 %v1389
    %v1662 = vunpack.c.h.b16 %v1389
    %v1663 = vunpack.c.l.b16 %v1390
    %v1664 = vunpack.c.h.b16 %v1390
    %v1665 = vunpack.c.l.b16 %v1391
    %v1666 = vunpack.c.h.b16 %v1391
    %v1667 = vunpack.c.l.b16 %v1392
    %v1668 = vunpack.c.h.b16 %v1392
    %v1669 = vunpack.c.l.b16 %v1393
    %v1670 = vunpack.c.h.b16 %v1393
    %v1671 = vunpack.c.l.b16 %v1394
    %v1672 = vunpack.c.h.b16 %v1394
    %v1673 = vunpack.c.l.b16 %v1395
    %v1674 = vunpack.c.h.b16 %v1395
    %v1675 = vunpack.c.l.b16 %v1396
    %v1676 = vunpack.c.h.b16 %v1396
    %v1677 = vunpack.c.l.b16 %v1397
    %v1678 = vunpack.c.h.b16 %v1397
    %v1679 = vunpack.c.l.b16 %v1398
    %v1680 = vunpack.c.h.b16 %v1398
    %v1681 = vunpack.c.l.b16 %v1399
    %v1682 = vunpack.c.h.b16 %v1399
    %v1683 = vunpack.c.l.b16 %v1400
    %v1684 = vunpack.c.h.b16 %v1400
    %v1685 = vunpack.c.l.b16 %v1401
    %v1686 = vunpack.c.h.b16 %v1401
    %v1687 = vunpack.c.l.b16 %v1402
    %v1688 = vunpack.c.h.b16 %v1402
    %v1689 = vunpack.c.l.b16 %v1403
    %v1690 = vunpack.c.h.b16 %v1403
    %v1691 = vunpack.c.l.b16 %v1404
    %v1692 = vunpack.c.h.b16 %v1404
    %v1693 = vpack.c.b16 %v1503, %v1501
    %v1694 = vpack.c.b16 %v1504, %v1502
    %v1695 = vpack.c.b16 %v1507, %v1505
    %v1696 = vpack.c.b16 %v1508, %v1506
    %v1697 = vpack.c.b16 %v1511, %v1509
    %v1698 = vpack.c.b16 %v1512, %v1510
    %v1699 = vpack.c.b16 %v1515, %v1513
    %v1700 = vpack.c.b16 %v1516, %v1514
    %v1701 = vpack.c.b16 %v1519, %v1517
    %v1702 = vpack.c.b16 %v1520, %v1518
    %v1703 = vpack.c.b16 %v1523, %v1521
    %v1704 = vpack.c.b16 %v1524, %v1522
    %v1705 = vpack.c.b16 %v1527, %v1525
    %v1706 = vpack.c.b16 %v1528, %v1526
    %v1707 = vpack.c.b16 %v1531, %v1529
    %v1708 = vpack.c.b16 %v1532, %v1530
    %v1709 = vpack.c.b16 %v1535, %v1533
    %v1710 = vpack.c.b16 %v1536, %v1534
    %v1711 = vpack.c.b16 %v1539, %v1537
    %v1712 = vpack.c.b16 %v1540, %v1538
    %v1713 = vpack.c.b16 %v1543, %v1541
    %v1714 = vpack.c.b16 %v1544, %v1542
    %v1715 = vpack.c.b16 %v1547, %v1545
    %v1716 = vpack.c.b16 %v1548, %v1546
    %v1717 = vpack.c.b16 %v1551, %v1549
    %v1718 = vpack.c.b16 %v1552, %v1550
    %v1719 = vpack.c.b16 %v1555, %v1553
    %v1720 = vpack.c.b16 %v1556, %v1554
    %v1721 = vpack.c.b16 %v1559, %v1557
    %v1722 = vpack.c.b16 %v1560, %v1558
    %v1723 = vpack.c.b16 %v1563, %v1561
    %v1724 = vpack.c.b16 %v1564, %v1562
    %v1725 = vpack.c.b16 %v1567, %v1565
    %v1726 = vpack.c.b16 %v1568, %v1566
    %v1727 = vpack.c.b16 %v1571, %v1569
    %v1728 = vpack.c.b16 %v1572, %v1570
    %v1729 = vpack.c.b16 %v1575, %v1573
    %v1730 = vpack.c.b16 %v1576, %v1574
    %v1731 = vpack.c.b16 %v1579, %v1577
    %v1732 = vpack.c.b16 %v1580, %v1578
    %v1733 = vpack.c.b16 %v1583, %v1581
    %v1734 = vpack.c.b16 %v1584, %v1582
    %v1735 = vpack.c.b16 %v1587, %v1585
    %v1736 = vpack.c.b16 %v1588, %v1586
    %v1737 = vpack.c.b16 %v1591, %v1589
    %v1738 = vpack.c.b16 %v1592, %v1590
    %v1739 = vpack.c.b16 %v1595, %v1593
    %v1740 = vpack.c.b16 %v1596, %v1594
    %v1741 = vpack.c.b16 %v1599, %v1597
    %v1742 = vpack.c.b16 %v1600, %v1598
    %v1743 = vpack.c.b16 %v1603, %v1601
    %v1744 = vpack.c.b16 %v1604, %v1602
    %v1745 = vpack.c.b16 %v1607, %v1605
    %v1746 = vpack.c.b16 %v1608, %v1606
    %v1747 = vpack.c.b16 %v1611, %v1609
    %v1748 = vpack.c.b16 %v1612, %v1610
    %v1749 = vpack.c.b16 %v1615, %v1613
    %v1750 = vpack.c.b16 %v1616, %v1614
    %v1751 = vpack.c.b16 %v1619, %v1617
    %v1752 = vpack.c.b16 %v1620, %v1618
    %v1753 = vpack.c.b16 %v1623, %v1621
    %v1754 = vpack.c.b16 %v1624, %v1622
    %v1755 = vpack.c.b16 %v1627, %v1625
    %v1756 = vpack.c.b16 %v1628, %v1626
    %v1757 = vpack.c.b16 %v1631, %v1629
    %v1758 = vpack.c.b16 %v1632, %v1630
    %v1759 = vpack.c.b16 %v1635, %v1633
    %v1760 = vpack.c.b16 %v1636, %v1634
    %v1761 = vpack.c.b16 %v1639, %v1637
    %v1762 = vpack.c.b16 %v1640, %v1638
    %v1763 = vpack.c.b16 %v1643, %v1641
    %v1764 = vpack.c.b16 %v1644, %v1642
    %v1765 = vpack.c.b16 %v1647, %v1645
    %v1766 = vpack.c.b16 %v1648, %v1646
    %v1767 = vpack.c.b16 %v1651, %v1649
    %v1768 = vpack.c.b16 %v1652, %v1650
    %v1769 = vpack.c.b16 %v1655, %v1653
    %v1770 = vpack.c.b16 %v1656, %v1654
    %v1771 = vpack.c.b16 %v1659, %v1657
    %v1772 = vpack.c.b16 %v1660, %v1658
    %v1773 = vpack.c.b16 %v1663, %v1661
    %v1774 = vpack.c.b16 %v1664, %v1662
    %v1775 = vpack.c.b16 %v1667, %v1665
    %v1776 = vpack.c.b16 %v1668, %v1666
    %v1777 = vpack.c.b16 %v1671, %v1669
    %v1778 = vpack.c.b16 %v1672, %v1670
    %v1779 = vpack.c.b16 %v1675, %v1673
    %v1780 = vpack.c.b16 %v1676, %v1674
    %v1781 = vpack.c.b16 %v1679, %v1677
    %v1782 = vpack.c.b16 %v1680, %v1678
    %v1783 = vpack.c.b16 %v1683, %v1681
    %v1784 = vpack.c.b16 %v1684, %v1682
    %v1785 = vpack.c.b16 %v1687, %v1685
    %v1786 = vpack.c.b16 %v1688, %v1686
    %v1787 = vpack.c.b16 %v1691, %v1689
    %v1788 = vpack.c.b16 %v1692, %v1690
    %1885 = vmatpush.bf16.msra.mxu0 %v1707
    %1886 = vmatpush.bf16.msra.mxu0 %v1705
    %1887 = vmatpush.bf16.msra.mxu0 %v1703
    %1888 = vmatpush.bf16.msra.mxu0 %v1701
    %1889 = vmatpush.bf16.msra.mxu0 %v1699
    %1890 = vmatpush.bf16.msra.mxu0 %v1697
    %1891 = vmatpush.bf16.msra.mxu0 %v1695
    %1892 = vmatpush.bf16.msra.mxu0 %v1693
    %1893 = vmatmul.bf16.gmra.mxu0 %v1297
    %v1894 = vpop.f32.mrf.mxu0
    %v1895 = vadd.f32 0.0, %v1894
    %v1896 = vpop.f32.mrf.mxu0
    %v1897 = vadd.f32 0.0, %v1896
    %1898 = vmatmul.bf16.gmra.mxu0 %v1303
    %v1899 = vpop.f32.mrf.mxu0
    %v1900 = vadd.f32 0.0, %v1899
    %v1901 = vpop.f32.mrf.mxu0
    %v1902 = vadd.f32 0.0, %v1901
    %1903 = vdwg.mxu0
    %1904 = vmatpush.bf16.msra.mxu0 %v1723
    %1905 = vmatpush.bf16.msra.mxu0 %v1721
    %1906 = vmatpush.bf16.msra.mxu0 %v1719
    %1907 = vmatpush.bf16.msra.mxu0 %v1717
    %1908 = vmatpush.bf16.msra.mxu0 %v1715
    %1909 = vmatpush.bf16.msra.mxu0 %v1713
    %1910 = vmatpush.bf16.msra.mxu0 %v1711
    %1911 = vmatpush.bf16.msra.mxu0 %v1709
    %1912 = vmatmul.bf16.gmra.mxu0 %v1298
    %v1913 = vpop.f32.mrf.mxu0
    %v1914 = vadd.f32 %v1895, %v1913
    %v1915 = vpop.f32.mrf.mxu0
    %v1916 = vadd.f32 %v1897, %v1915
    %1917 = vmatmul.bf16.gmra.mxu0 %v1304
    %v1918 = vpop.f32.mrf.mxu0
    %v1919 = vadd.f32 %v1900, %v1918
    %v1920 = vpop.f32.mrf.mxu0
    %v1921 = vadd.f32 %v1902, %v1920
    %1922 = vdwg.mxu0
    %1923 = vmatpush.bf16.msra.mxu0 %v1739
    %1924 = vmatpush.bf16.msra.mxu0 %v1737
    %1925 = vmatpush.bf16.msra.mxu0 %v1735
    %1926 = vmatpush.bf16.msra.mxu0 %v1733
    %1927 = vmatpush.bf16.msra.mxu0 %v1731
    %1928 = vmatpush.bf16.msra.mxu0 %v1729
    %1929 = vmatpush.bf16.msra.mxu0 %v1727
    %1930 = vmatpush.bf16.msra.mxu0 %v1725
    %1931 = vmatmul.bf16.gmra.mxu0 %v1299
    %v1932 = vpop.f32.mrf.mxu0
    %v1933 = vadd.f32 %v1914, %v1932
    %v1934 = vpop.f32.mrf.mxu0
    %v1935 = vadd.f32 %v1916, %v1934
    %1936 = vmatmul.bf16.gmra.mxu0 %v1305
    %v1937 = vpop.f32.mrf.mxu0
    %v1938 = vadd.f32 %v1919, %v1937
    %v1939 = vpop.f32.mrf.mxu0
    %v1940 = vadd.f32 %v1921, %v1939
    %1941 = vdwg.mxu0
    %1942 = vmatpush.bf16.msra.mxu0 %v1755
    %1943 = vmatpush.bf16.msra.mxu0 %v1753
    %1944 = vmatpush.bf16.msra.mxu0 %v1751
    %1945 = vmatpush.bf16.msra.mxu0 %v1749
    %1946 = vmatpush.bf16.msra.mxu0 %v1747
    %1947 = vmatpush.bf16.msra.mxu0 %v1745
    %1948 = vmatpush.bf16.msra.mxu0 %v1743
    %1949 = vmatpush.bf16.msra.mxu0 %v1741
    %1950 = vmatmul.bf16.gmra.mxu0 %v1300
    %v1951 = vpop.f32.mrf.mxu0
    %v1952 = vadd.f32 %v1933, %v1951
    %v1953 = vpop.f32.mrf.mxu0
    %v1954 = vadd.f32 %v1935, %v1953
    %1955 = vmatmul.bf16.gmra.mxu0 %v1306
    %v1956 = vpop.f32.mrf.mxu0
    %v1957 = vadd.f32 %v1938, %v1956
    %v1958 = vpop.f32.mrf.mxu0
    %v1959 = vadd.f32 %v1940, %v1958
    %1960 = vdwg.mxu0
    %1961 = vmatpush.bf16.msra.mxu0 %v1771
    %1962 = vmatpush.bf16.msra.mxu0 %v1769
    %1963 = vmatpush.bf16.msra.mxu0 %v1767
    %1964 = vmatpush.bf16.msra.mxu0 %v1765
    %1965 = vmatpush.bf16.msra.mxu0 %v1763
    %1966 = vmatpush.bf16.msra.mxu0 %v1761
    %1967 = vmatpush.bf16.msra.mxu0 %v1759
    %1968 = vmatpush.bf16.msra.mxu0 %v1757
    %1969 = vmatmul.bf16.gmra.mxu0 %v1301
    %v1970 = vpop.f32.mrf.mxu0
    %v1971 = vadd.f32 %v1952, %v1970
    %v1972 = vpop.f32.mrf.mxu0
    %v1973 = vadd.f32 %v1954, %v1972
    %1974 = vmatmul.bf16.gmra.mxu0 %v1307
    %v1975 = vpop.f32.mrf.mxu0
    %v1976 = vadd.f32 %v1957, %v1975
    %v1977 = vpop.f32.mrf.mxu0
    %v1978 = vadd.f32 %v1959, %v1977
    %1979 = vdwg.mxu0
    %1980 = vmatpush.bf16.msra.mxu0 %v1787
    %1981 = vmatpush.bf16.msra.mxu0 %v1785
    %1982 = vmatpush.bf16.msra.mxu0 %v1783
    %1983 = vmatpush.bf16.msra.mxu0 %v1781
    %1984 = vmatpush.bf16.msra.mxu0 %v1779
    %1985 = vmatpush.bf16.msra.mxu0 %v1777
    %1986 = vmatpush.bf16.msra.mxu0 %v1775
    %1987 = vmatpush.bf16.msra.mxu0 %v1773
    %1988 = vmatmul.bf16.gmra.mxu0 %v1302
    %v1989 = vpop.f32.mrf.mxu0
    %v1990 = vadd.f32 %v1971, %v1989
    %v1991 = vpop.f32.mrf.mxu0
    %v1992 = vadd.f32 %v1973, %v1991
    %1993 = vmatmul.bf16.gmra.mxu0 %v1308
    %v1994 = vpop.f32.mrf.mxu0
    %v1995 = vadd.f32 %v1976, %v1994
    %v1996 = vpop.f32.mrf.mxu0
    %v1997 = vadd.f32 %v1978, %v1996
    %1998 = vdwg.mxu0
    %1999 = vmatpush.bf16.msra.mxu0 %v1708
    %2000 = vmatpush.bf16.msra.mxu0 %v1706
    %2001 = vmatpush.bf16.msra.mxu0 %v1704
    %2002 = vmatpush.bf16.msra.mxu0 %v1702
    %2003 = vmatpush.bf16.msra.mxu0 %v1700
    %2004 = vmatpush.bf16.msra.mxu0 %v1698
    %2005 = vmatpush.bf16.msra.mxu0 %v1696
    %2006 = vmatpush.bf16.msra.mxu0 %v1694
    %2007 = vmatmul.bf16.gmra.mxu0 %v1297
    %v2008 = vpop.f32.mrf.mxu0
    %v2009 = vadd.f32 0.0, %v2008
    %v2010 = vpop.f32.mrf.mxu0
    %v2011 = vadd.f32 0.0, %v2010
    %2012 = vmatmul.bf16.gmra.mxu0 %v1303
    %v2013 = vpop.f32.mrf.mxu0
    %v2014 = vadd.f32 0.0, %v2013
    %v2015 = vpop.f32.mrf.mxu0
    %v2016 = vadd.f32 0.0, %v2015
    %2017 = vdwg.mxu0
    %2018 = vmatpush.bf16.msra.mxu0 %v1724
    %2019 = vmatpush.bf16.msra.mxu0 %v1722
    %2020 = vmatpush.bf16.msra.mxu0 %v1720
    %2021 = vmatpush.bf16.msra.mxu0 %v1718
    %2022 = vmatpush.bf16.msra.mxu0 %v1716
    %2023 = vmatpush.bf16.msra.mxu0 %v1714
    %2024 = vmatpush.bf16.msra.mxu0 %v1712
    %2025 = vmatpush.bf16.msra.mxu0 %v1710
    %2026 = vmatmul.bf16.gmra.mxu0 %v1298
    %v2027 = vpop.f32.mrf.mxu0
    %v2028 = vadd.f32 %v2009, %v2027
    %v2029 = vpop.f32.mrf.mxu0
    %v2030 = vadd.f32 %v2011, %v2029
    %2031 = vmatmul.bf16.gmra.mxu0 %v1304
    %v2032 = vpop.f32.mrf.mxu0
    %v2033 = vadd.f32 %v2014, %v2032
    %v2034 = vpop.f32.mrf.mxu0
    %v2035 = vadd.f32 %v2016, %v2034
    %2036 = vdwg.mxu0
    %2037 = vmatpush.bf16.msra.mxu0 %v1740
    %2038 = vmatpush.bf16.msra.mxu0 %v1738
    %2039 = vmatpush.bf16.msra.mxu0 %v1736
    %2040 = vmatpush.bf16.msra.mxu0 %v1734
    %2041 = vmatpush.bf16.msra.mxu0 %v1732
    %2042 = vmatpush.bf16.msra.mxu0 %v1730
    %2043 = vmatpush.bf16.msra.mxu0 %v1728
    %2044 = vmatpush.bf16.msra.mxu0 %v1726
    %2045 = vmatmul.bf16.gmra.mxu0 %v1299
    %v2046 = vpop.f32.mrf.mxu0
    %v2047 = vadd.f32 %v2028, %v2046
    %v2048 = vpop.f32.mrf.mxu0
    %v2049 = vadd.f32 %v2030, %v2048
    %2050 = vmatmul.bf16.gmra.mxu0 %v1305
    %v2051 = vpop.f32.mrf.mxu0
    %v2052 = vadd.f32 %v2033, %v2051
    %v2053 = vpop.f32.mrf.mxu0
    %v2054 = vadd.f32 %v2035, %v2053
    %2055 = vdwg.mxu0
    %2056 = vmatpush.bf16.msra.mxu0 %v1756
    %2057 = vmatpush.bf16.msra.mxu0 %v1754
    %2058 = vmatpush.bf16.msra.mxu0 %v1752
    %2059 = vmatpush.bf16.msra.mxu0 %v1750
    %2060 = vmatpush.bf16.msra.mxu0 %v1748
    %2061 = vmatpush.bf16.msra.mxu0 %v1746
    %2062 = vmatpush.bf16.msra.mxu0 %v1744
    %2063 = vmatpush.bf16.msra.mxu0 %v1742
    %2064 = vmatmul.bf16.gmra.mxu0 %v1300
    %v2065 = vpop.f32.mrf.mxu0
    %v2066 = vadd.f32 %v2047, %v2065
    %v2067 = vpop.f32.mrf.mxu0
    %v2068 = vadd.f32 %v2049, %v2067
    %2069 = vmatmul.bf16.gmra.mxu0 %v1306
    %v2070 = vpop.f32.mrf.mxu0
    %v2071 = vadd.f32 %v2052, %v2070
    %v2072 = vpop.f32.mrf.mxu0
    %v2073 = vadd.f32 %v2054, %v2072
    %2074 = vdwg.mxu0
    %2075 = vmatpush.bf16.msra.mxu0 %v1772
    %2076 = vmatpush.bf16.msra.mxu0 %v1770
    %2077 = vmatpush.bf16.msra.mxu0 %v1768
    %2078 = vmatpush.bf16.msra.mxu0 %v1766
    %2079 = vmatpush.bf16.msra.mxu0 %v1764
    %2080 = vmatpush.bf16.msra.mxu0 %v1762
    %2081 = vmatpush.bf16.msra.mxu0 %v1760
    %2082 = vmatpush.bf16.msra.mxu0 %v1758
    %2083 = vmatmul.bf16.gmra.mxu0 %v1301
    %v2084 = vpop.f32.mrf.mxu0
    %v2085 = vadd.f32 %v2066, %v2084
    %v2086 = vpop.f32.mrf.mxu0
    %v2087 = vadd.f32 %v2068, %v2086
    %2088 = vmatmul.bf16.gmra.mxu0 %v1307
    %v2089 = vpop.f32.mrf.mxu0
    %v2090 = vadd.f32 %v2071, %v2089
    %v2091 = vpop.f32.mrf.mxu0
    %v2092 = vadd.f32 %v2073, %v2091
    %2093 = vdwg.mxu0
    %2094 = vmatpush.bf16.msra.mxu0 %v1788
    %2095 = vmatpush.bf16.msra.mxu0 %v1786
    %2096 = vmatpush.bf16.msra.mxu0 %v1784
    %2097 = vmatpush.bf16.msra.mxu0 %v1782
    %2098 = vmatpush.bf16.msra.mxu0 %v1780
    %2099 = vmatpush.bf16.msra.mxu0 %v1778
    %2100 = vmatpush.bf16.msra.mxu0 %v1776
    %2101 = vmatpush.bf16.msra.mxu0 %v1774
    %2102 = vmatmul.bf16.gmra.mxu0 %v1302
    %v2103 = vpop.f32.mrf.mxu0
    %v2104 = vadd.f32 %v2085, %v2103
    %v2105 = vpop.f32.mrf.mxu0
    %v2106 = vadd.f32 %v2087, %v2105
    %2107 = vmatmul.bf16.gmra.mxu0 %v1308
    %v2108 = vpop.f32.mrf.mxu0
    %v2109 = vadd.f32 %v2090, %v2108
    %v2110 = vpop.f32.mrf.mxu0
    %v2111 = vadd.f32 %v2092, %v2110
    %2112 = vdwg.mxu0
    %v2113 = vld [vmem:[%s5] sm:$0x1]
    %v2114 = vld [vmem:[%s6] sm:$0x1]
    %v2115 = vadd.f32 %v1990, %v1992
    %v2116 = vadd.f32 %v2115, %v1995
    %v2117 = vadd.f32 %v2116, %v1997
    %v2118 = vrot.slane %v2117, 4
    %v2119 = vadd.f32 %v2117, %v2118
    %v2120 = vrot.slane %v2119, 2
    %v2121 = vadd.f32 %v2119, %v2120
    %v2122 = vrot.slane %v2121, 1
    %v2123 = vadd.f32 %v2121, %v2122
    %v2124 = vadd.f32 %v2104, %v2106
    %v2125 = vadd.f32 %v2124, %v2109
    %v2126 = vadd.f32 %v2125, %v2111
    %v2127 = vrot.slane %v2126, 4
    %v2128 = vadd.f32 %v2126, %v2127
    %v2129 = vrot.slane %v2128, 2
    %v2130 = vadd.f32 %v2128, %v2129
    %v2131 = vrot.slane %v2130, 1
    %v2132 = vadd.f32 %v2130, %v2131
    %v2133 = vmul.f32 %v1990, %v1990
    %v2134 = vmul.f32 %v2104, %v2104
    %v2135 = vmul.f32 %v1992, %v1992
    %v2136 = vmul.f32 %v2106, %v2106
    %v2137 = vmul.f32 %v1995, %v1995
    %v2138 = vmul.f32 %v2109, %v2109
    %v2139 = vmul.f32 %v1997, %v1997
    %v2140 = vmul.f32 %v2111, %v2111
    %v2141 = vadd.f32 %v2133, %v2135
    %v2142 = vadd.f32 %v2141, %v2137
    %v2143 = vadd.f32 %v2142, %v2139
    %v2144 = vrot.slane %v2143, 4
    %v2145 = vadd.f32 %v2143, %v2144
    %v2146 = vrot.slane %v2145, 2
    %v2147 = vadd.f32 %v2145, %v2146
    %v2148 = vrot.slane %v2147, 1
    %v2149 = vadd.f32 %v2147, %v2148
    %v2150 = vadd.f32 %v2134, %v2136
    %v2151 = vadd.f32 %v2150, %v2138
    %v2152 = vadd.f32 %v2151, %v2140
    %v2153 = vrot.slane %v2152, 4
    %v2154 = vadd.f32 %v2152, %v2153
    %v2155 = vrot.slane %v2154, 2
    %v2156 = vadd.f32 %v2154, %v2155
    %v2157 = vrot.slane %v2156, 1
    %v2158 = vadd.f32 %v2156, %v2157
    %2159 = vmatpush.msra.mxu0 %v68
    %2160 = vmatpush.msra.mxu0 %v67
    %2161 = vmatpush.msra.mxu0 %v66
    %2162 = vmatpush.msra.mxu0 %v65
    %2163 = vmatpush.msra.mxu0 %v64
    %2164 = vmatpush.msra.mxu0 %v63
    %2165 = vmatpush.msra.mxu0 %v62
    %2166 = vmatpush.msra.mxu0 %v61
    %2167 = vmatpush.msra.mxu0 %v60
    %2168 = vmatpush.msra.mxu0 %v59
    %2169 = vmatpush.msra.mxu0 %v58
    %2170 = vmatpush.msra.mxu0 %v57
    %2171 = vmatpush.msra.mxu0 %v56
    %2172 = vmatpush.msra.mxu0 %v55
    %2173 = vmatpush.msra.mxu0 %v54
    %2174 = vmatpush.msra.mxu0 %v53
    %2175 = vmatmul.f32.gmra.mxu0 %v2123
    %v2176 = vpop.f32.mrf.mxu0
    %v2177 = vadd.f32 0.0, %v2176
    %2178 = vdwg.mxu0
    %2179 = vmatpush.msra.mxu0 %v84
    %2180 = vmatpush.msra.mxu0 %v83
    %2181 = vmatpush.msra.mxu0 %v82
    %2182 = vmatpush.msra.mxu0 %v81
    %2183 = vmatpush.msra.mxu0 %v80
    %2184 = vmatpush.msra.mxu0 %v79
    %2185 = vmatpush.msra.mxu0 %v78
    %2186 = vmatpush.msra.mxu0 %v77
    %2187 = vmatpush.msra.mxu0 %v76
    %2188 = vmatpush.msra.mxu0 %v75
    %2189 = vmatpush.msra.mxu0 %v74
    %2190 = vmatpush.msra.mxu0 %v73
    %2191 = vmatpush.msra.mxu0 %v72
    %2192 = vmatpush.msra.mxu0 %v71
    %2193 = vmatpush.msra.mxu0 %v70
    %2194 = vmatpush.msra.mxu0 %v69
    %2195 = vmatmul.f32.gmra.mxu0 %v2132
    %v2196 = vpop.f32.mrf.mxu0
    %v2197 = vadd.f32 %v2177, %v2196
    %2198 = vdwg.mxu0
    %2199 = vmatpush.msra.mxu0 %v68
    %2200 = vmatpush.msra.mxu0 %v67
    %2201 = vmatpush.msra.mxu0 %v66
    %2202 = vmatpush.msra.mxu0 %v65
    %2203 = vmatpush.msra.mxu0 %v64
    %2204 = vmatpush.msra.mxu0 %v63
    %2205 = vmatpush.msra.mxu0 %v62
    %2206 = vmatpush.msra.mxu0 %v61
    %2207 = vmatpush.msra.mxu0 %v60
    %2208 = vmatpush.msra.mxu0 %v59
    %2209 = vmatpush.msra.mxu0 %v58
    %2210 = vmatpush.msra.mxu0 %v57
    %2211 = vmatpush.msra.mxu0 %v56
    %2212 = vmatpush.msra.mxu0 %v55
    %2213 = vmatpush.msra.mxu0 %v54
    %2214 = vmatpush.msra.mxu0 %v53
    %2215 = vmatmul.f32.gmra.mxu0 %v2149
    %v2216 = vpop.f32.mrf.mxu0
    %v2217 = vadd.f32 0.0, %v2216
    %2218 = vdwg.mxu0
    %2219 = vmatpush.msra.mxu0 %v84
    %2220 = vmatpush.msra.mxu0 %v83
    %2221 = vmatpush.msra.mxu0 %v82
    %2222 = vmatpush.msra.mxu0 %v81
    %2223 = vmatpush.msra.mxu0 %v80
    %2224 = vmatpush.msra.mxu0 %v79
    %2225 = vmatpush.msra.mxu0 %v78
    %2226 = vmatpush.msra.mxu0 %v77
    %2227 = vmatpush.msra.mxu0 %v76
    %2228 = vmatpush.msra.mxu0 %v75
    %2229 = vmatpush.msra.mxu0 %v74
    %2230 = vmatpush.msra.mxu0 %v73
    %2231 = vmatpush.msra.mxu0 %v72
    %2232 = vmatpush.msra.mxu0 %v71
    %2233 = vmatpush.msra.mxu0 %v70
    %2234 = vmatpush.msra.mxu0 %v69
    %2235 = vmatmul.f32.gmra.mxu0 %v2158
    %v2236 = vpop.f32.mrf.mxu0
    %v2237 = vadd.f32 %v2217, %v2236
    %2238 = vdwg.mxu0
    %v2239 = vmul.f32 %v2197, 0.001953125
    %v2240 = vmul.f32 %v2237, 0.001953125
    %v2241 = vmul.f32 %v2239, %v2239
    %v2242 = vsub.f32 %v2240, %v2241
    %v2243 = vadd.f32 %v2242, 1e-05
    %v2244 = vrsqrt.pop %v2243
    %v2245 = vmul.f32 %v2244, %v2243
    %v2246 = vmul.f32 %v2245, %v2244
    %v2247 = vmul.f32 0.5, %v2246
    %v2248 = vsub.f32 1.5, %v2247
    %v2249 = vmul.f32 %v2244, %v2248
    %vm2250 = vweird.f32 %v2243
    %vm2251 = vweird.f32 %v2244
    %vm2252 = vmor %vm2250, %vm2251
    %v2253 = vsel %vm2252, %v2244, %v2249
    %v2254 = vmul.f32 %v2113, %v2253
    %v2255 = vmul.f32 %v2239, %v2254
    %v2256 = vsub.f32 %v2114, %v2255
    %v2258 = vperm.slane %v2254, 0
    %2259 = vrot.lane.b32.xlu0 %v2258, 16
    %v2260 = vpop.permute.xlu0 %2259
    %2262 = vrot.lane.b32.xlu0 %v2258, 32
    %v2263 = vpop.permute.xlu0 %2262
    %2265 = vrot.lane.b32.xlu0 %v2258, 48
    %v2266 = vpop.permute.xlu0 %2265
    %2268 = vrot.lane.b32.xlu0 %v2258, 64
    %v2269 = vpop.permute.xlu0 %2268
    %2271 = vrot.lane.b32.xlu0 %v2258, 80
    %v2272 = vpop.permute.xlu0 %2271
    %2274 = vrot.lane.b32.xlu0 %v2258, 96
    %v2275 = vpop.permute.xlu0 %2274
    %2277 = vrot.lane.b32.xlu0 %v2258, 112
    %v2278 = vpop.permute.xlu0 %2277
    %v2280 = vsel %vm1179, %v2254, %v2260
    %v2281 = vsel %vm1181, %v2280, %v2263
    %v2282 = vsel %vm1183, %v2281, %v2266
    %v2283 = vsel %vm1185, %v2282, %v2269
    %v2284 = vsel %vm1187, %v2283, %v2272
    %v2285 = vsel %vm1189, %v2284, %v2275
    %v2286 = vsel %vm1191, %v2285, %v2278
    %v2288 = vperm.slane %v2256, 0
    %2289 = vrot.lane.b32.xlu0 %v2288, 16
    %v2290 = vpop.permute.xlu0 %2289
    %2292 = vrot.lane.b32.xlu0 %v2288, 32
    %v2293 = vpop.permute.xlu0 %2292
    %2295 = vrot.lane.b32.xlu0 %v2288, 48
    %v2296 = vpop.permute.xlu0 %2295
    %2298 = vrot.lane.b32.xlu0 %v2288, 64
    %v2299 = vpop.permute.xlu0 %2298
    %2301 = vrot.lane.b32.xlu0 %v2288, 80
    %v2302 = vpop.permute.xlu0 %2301
    %2304 = vrot.lane.b32.xlu0 %v2288, 96
    %v2305 = vpop.permute.xlu0 %2304
    %2307 = vrot.lane.b32.xlu0 %v2288, 112
    %v2308 = vpop.permute.xlu0 %2307
    %v2310 = vsel %vm1179, %v2256, %v2290
    %v2311 = vsel %vm1181, %v2310, %v2293
    %v2312 = vsel %vm1183, %v2311, %v2296
    %v2313 = vsel %vm1185, %v2312, %v2299
    %v2314 = vsel %vm1187, %v2313, %v2302
    %v2315 = vsel %vm1189, %v2314, %v2305
    %v2316 = vsel %vm1191, %v2315, %v2308
    %v2317 = vperm.slane %v2286, 0
    %v2318 = vmul.f32 %v1990, %v2317
    %v2319 = vmul.f32 %v2104, %v2317
    %v2320 = vmul.f32 %v1992, %v2317
    %v2321 = vmul.f32 %v2106, %v2317
    %v2322 = vmul.f32 %v1995, %v2317
    %v2323 = vmul.f32 %v2109, %v2317
    %v2324 = vmul.f32 %v1997, %v2317
    %v2325 = vmul.f32 %v2111, %v2317
    %v2326 = vperm.slane %v2316, 0
    %v2327 = vadd.f32 %v2318, %v2326
    %v2328 = vadd.f32 %v2319, %v2326
    %v2329 = vadd.f32 %v2320, %v2326
    %v2330 = vadd.f32 %v2321, %v2326
    %v2331 = vadd.f32 %v2322, %v2326
    %v2332 = vadd.f32 %v2323, %v2326
    %v2333 = vadd.f32 %v2324, %v2326
    %v2334 = vadd.f32 %v2325, %v2326
    %v2335 = vadd.f32 %v2327, %v45
    %v2336 = vadd.f32 %v2328, %v46
    %v2337 = vadd.f32 %v2329, %v47
    %v2338 = vadd.f32 %v2330, %v48
    %v2339 = vadd.f32 %v2331, %v49
    %v2340 = vadd.f32 %v2332, %v50
    %v2341 = vadd.f32 %v2333, %v51
    %v2342 = vadd.f32 %v2334, %v52
    %v2343 = vmax.f32 %v2335, 0.0
    %v2344 = vmax.f32 %v2336, 0.0
    %v2345 = vmax.f32 %v2337, 0.0
    %v2346 = vmax.f32 %v2338, 0.0
    %v2347 = vmax.f32 %v2339, 0.0
    %v2348 = vmax.f32 %v2340, 0.0
    %v2349 = vmax.f32 %v2341, 0.0
    %v2350 = vmax.f32 %v2342, 0.0
    %2351 = vst [vmem:[%s8] sm:$0xff] %v2343
    %2352 = vst [vmem:[%s8 + $0x8] sm:$0xff] %v2344
    %2353 = vst [vmem:[%s8 + $0x10] sm:$0xff] %v2345
    %2354 = vst [vmem:[%s8 + $0x18] sm:$0xff] %v2346
    %2355 = vst [vmem:[%s8 + $0x20] sm:$0xff] %v2347
    %2356 = vst [vmem:[%s8 + $0x28] sm:$0xff] %v2348
    %2357 = vst [vmem:[%s8 + $0x30] sm:$0xff] %v2349
    %2358 = vst [vmem:[%s8 + $0x38] sm:$0xff] %v2350
    // Predicated region
    $region38: #{residual_block_forward_nhwc.1} parent=1 // pred_check
      _
    $region39: #{residual_block_forward_nhwc.1} parent=1 // pred_check_branch
      %2360 = sbr.rel (0) target = $region41
    $region40: #{residual_block_forward_nhwc.1} parent=1 // pred_region
      _
    $region41: #{residual_block_forward_nhwc.1} parent=1 // pred_fallthru
      _
    // Predicated region
    $region42: #{residual_block_forward_nhwc.1} parent=1 // pred_check
      _
    $region43: #{residual_block_forward_nhwc.1} parent=1 // pred_check_branch
      %2362 = sbr.rel (0) target = $region45
    $region44: #{residual_block_forward_nhwc.1} parent=1 // pred_region
      _
    $region45: #{residual_block_forward_nhwc.1} parent=1 // pred_fallthru
      _
    %2363 = vsyncpa [#allocation3], 1

</llo_original>
